<compile_context>
chip_gen: v6e
topology: v6e:2x2x1
jax: 0.10.0
libtpu: 0.0.40
codegen_flags: <defaults>
</compile_context>

<pallas_src>
import functools

import jax
import jax.numpy as jnp
from jax.experimental import pallas as pl
from jax.experimental.pallas import tpu as pltpu

LANE = 128   # TPU vreg lane width
SUB = 8      # TPU vreg sublane count (f32)


# --------------------------------------------------------------------------- #
# Kernel: one decode step per grid iteration, weights/enc resident in VMEM
# --------------------------------------------------------------------------- #
def decoder_kernel(x_ref, s_init_ref, enc_ref,
                   wa_e_ref, wa_s_ref, v_ref,
                   wfc_ref, bfc_ref,
                   w0_ref, b0_ref,
                   w1_ref, b1_ref,
                   wout_ref, bout_ref,
                   pre_ref, s_out_ref,
                   eproj_ref, h_ref):
    t = pl.program_id(0)
    S, Bp, Hep = enc_ref.shape
    Hdp = s_init_ref.shape[-1]

    # ---- once per sequence: init hidden-state carry + cache enc @ Wa_e -------
    @pl.when(t == 0)
    def _init():
        h_ref[...] = s_init_ref[...]
        enc2d = enc_ref[...].reshape(S * Bp, Hep).astype(jnp.bfloat16)
        eproj_ref[...] = jnp.dot(
            enc2d, wa_e_ref[...], preferred_element_type=jnp.float32
        ).reshape(S, Bp, Hdp)

    s0 = h_ref[0]                       # (Bp, Hdp)  layer-0 hidden carry
    s1 = h_ref[1]                       # (Bp, Hdp)  layer-1 (top) hidden carry
    x_in = x_ref[0]                     # (Bp, Fp)
    enc = enc_ref[...]                  # (S, Bp, Hep) f32

    # ---- additive (Bahdanau) attention over the encoder sequence ------------
    # TODO(synk): Attn is injected via the ctor in the PyTorch code; standard
    # additive attention using the top-layer hidden state is implemented.
    s_proj = jnp.dot(s1.astype(jnp.bfloat16), wa_s_ref[...],
                     preferred_element_type=jnp.float32)            # (Bp, Hdp)
    energy = jnp.tanh(eproj_ref[...] + s_proj[None])                # (S, Bp, Hdp)
    logits = jnp.sum(energy * v_ref[...][None], axis=-1,
                     keepdims=True)                                 # (S, Bp, 1)

    # softmax over the sequence axis; divide goes to the EUP reciprocal slot
    m = jnp.max(logits, axis=0, keepdims=True)
    e = jnp.exp(logits - m)
    att = e * pl.reciprocal(jnp.sum(e, axis=0, keepdims=True), approx=True)

    # context = bmm(att, enc)  ==  sum_s att[s, b] * enc[s, b, :]
    ctx = jnp.sum(att * enc, axis=0)                                # (Bp, Hep)

    # ---- dec_input_tt = fc(cat([context, dec_input], -1)) — one fused dot ----
    z = jnp.concatenate([ctx, x_in], axis=1).astype(jnp.bfloat16)   # (Bp, Hep+Fp)
    fc_out = (jnp.dot(z, wfc_ref[...], preferred_element_type=jnp.float32)
              + bfc_ref[...])                                       # (Bp, Fp)

    # ---- 2-layer LSTM, single step, c0 = 0 (forget gate dropped), eval mode --
    def lstm_step(x, h, w_ref, b_ref):
        zz = jnp.concatenate([x, h], axis=1).astype(jnp.bfloat16)   # (Bp, In+Hdp)
        g = (jnp.dot(zz, w_ref[...], preferred_element_type=jnp.float32)
             + b_ref[...])                                          # (Bp, 3*Hdp)
        i = jax.nn.sigmoid(g[:, 0:Hdp])             # 128-lane-aligned slices
        c = i * jnp.tanh(g[:, Hdp:2 * Hdp])         # f * c0 == 0
        o = jax.nn.sigmoid(g[:, 2 * Hdp:3 * Hdp])
        return o * jnp.tanh(c)

    h0 = lstm_step(fc_out, s0, w0_ref, b0_ref)
    h1 = lstm_step(h0, s1, w1_ref, b1_ref)

    # ---- pre = linear(de_output)  (lane-dense per-step row of the slab) ------
    pre_ref[0] = (jnp.dot(h1.astype(jnp.bfloat16), wout_ref[...],
                          preferred_element_type=jnp.float32) + bout_ref[...])

    # carry hidden state to the next step; resident output written back once
    h_ref[0] = h0
    h_ref[1] = h1
    s_out_ref[0] = h0
    s_out_ref[1] = h1


# --------------------------------------------------------------------------- #
# One-time preparation (hoisted out of the per-step path)
# --------------------------------------------------------------------------- #
def _pad2(x, rows, cols, dtype=jnp.float32):
    r, c = x.shape
    return jnp.zeros((rows, cols), jnp.float32).at[:r, :c].set(x).astype(dtype)


def prepare_weights(P, F, He, Hd, O):
    """Pre-transpose weights to (in, out), fuse shared-operand matmuls, drop the
    dead forget gate (c0 == 0), zero-pad to 128-lane shapes and store matmul
    weights in bf16 (biases / VPU-side tensors stay f32). Call ONCE and cache."""
    Fp = Hep = Hdp = Op = LANE

    wa_e = _pad2(P["wa_e"].T, Hep, Hdp, jnp.bfloat16)
    wa_s = _pad2(P["wa_s"].T, Hdp, Hdp, jnp.bfloat16)
    v = _pad2(P["v"], 1, Hdp)                                   # f32, VPU side

    # fc: input laid out as [context (Hep) | dec_input (Fp)]
    wfc = jnp.zeros((Hep + Fp, Fp), jnp.float32)
    wfc = wfc.at[:He, :F].set(P["wfc_c"].T)
    wfc = wfc.at[Hep:Hep + F, :F].set(P["wfc_x"].T)
    wfc = wfc.astype(jnp.bfloat16)
    bfc = _pad2(P["bfc"], 1, Fp)

    def lstm_prep(wih, whh, b, in_dim, in_pad):
        # PyTorch gate order (i, f, g, o); keep only (i, g, o) since c0 = 0.
        keep = (slice(0, Hd), slice(2 * Hd, 3 * Hd), slice(3 * Hd, 4 * Hd))
        W = jnp.zeros((in_pad + Hdp, 3 * Hdp), jnp.float32)
        Bm = jnp.zeros((1, 3 * Hdp), jnp.float32)
        for gi, rs in enumerate(keep):
            W = W.at[:in_dim, gi * Hdp:gi * Hdp + Hd].set(wih[rs].T)
            W = W.at[in_pad:in_pad + Hd, gi * Hdp:gi * Hdp + Hd].set(whh[rs].T)
            Bm = Bm.at[:, gi * Hdp:gi * Hdp + Hd].set(b[:, rs])
        return W.astype(jnp.bfloat16), Bm

    w0, b0 = lstm_prep(P["wih0"], P["whh0"], P["b0"], F, Fp)
    w1, b1 = lstm_prep(P["wih1"], P["whh1"], P["b1"], Hd, Hdp)

    wout = _pad2(P["wout"].T, Hdp, Op, jnp.bfloat16)
    bout = _pad2(P["bout"], 1, Op)
    return (wa_e, wa_s, v, wfc, bfc, w0, b0, w1, b1, wout, bout)


def prepare_encoder(enc_output, He):
    """Pad enc_output once per sequence; it stays resident in VMEM across steps."""
    S, B, _ = enc_output.shape
    Bp = max(SUB, ((B + SUB - 1) // SUB) * SUB)
    return jnp.zeros((S, Bp, LANE), jnp.float32).at[:, :B, :He].set(enc_output)


# --------------------------------------------------------------------------- #
# Jitted multi-step driver: one pallas_call, grid over decode steps
# --------------------------------------------------------------------------- #
@functools.partial(jax.jit, static_argnames=("B", "F", "Hd", "O"))
def decoder_steps(enc_p, weights, dec_inputs, s, *, B, F, Hd, O):
    """dec_inputs: (T, 1, B, F) teacher-forced step inputs; s: (2, B, Hd)."""
    T = dec_inputs.shape[0]
    S, Bp, Hep = enc_p.shape
    Fp = Hdp = Op = LANE

    # only the tiny per-step activations are padded here
    dec_p = jnp.zeros((T, Bp, Fp), jnp.float32).at[:, :B, :F].set(dec_inputs[:, 0])
    s_p = jnp.zeros((2, Bp, Hdp), jnp.float32).at[:, :B, :Hd].set(s)

    in_specs = [
        pl.BlockSpec((1, Bp, Fp), lambda t: (t, 0, 0)),          # per-step input
        pl.BlockSpec((2, Bp, Hdp), lambda t: (0, 0, 0)),         # initial state
        pl.BlockSpec((S, Bp, Hep), lambda t: (0, 0, 0)),         # enc (resident)
        pl.BlockSpec((Hep, Hdp), lambda t: (0, 0)),              # wa_e
        pl.BlockSpec((Hdp, Hdp), lambda t: (0, 0)),              # wa_s
        pl.BlockSpec((1, Hdp), lambda t: (0, 0)),                # v
        pl.BlockSpec((Hep + Fp, Fp), lambda t: (0, 0)),          # wfc
        pl.BlockSpec((1, Fp), lambda t: (0, 0)),                 # bfc
        pl.BlockSpec((Fp + Hdp, 3 * Hdp), lambda t: (0, 0)),     # w0
        pl.BlockSpec((1, 3 * Hdp), lambda t: (0, 0)),            # b0
        pl.BlockSpec((2 * Hdp, 3 * Hdp), lambda t: (0, 0)),      # w1
        pl.BlockSpec((1, 3 * Hdp), lambda t: (0, 0)),            # b1
        pl.BlockSpec((Hdp, Op), lambda t: (0, 0)),               # wout
        pl.BlockSpec((1, Op), lambda t: (0, 0)),                 # bout
    ]
    out_specs = (
        pl.BlockSpec((1, Bp, Op), lambda t: (t, 0, 0)),          # lane-dense slab
        pl.BlockSpec((2, Bp, Hdp), lambda t: (0, 0, 0)),         # final state
    )

    # TODO(synk): for multiple independent decode streams, add a leading
    # "parallel" grid axis so v7x megacore splits the streams across its 2 TCs.
    pre_p, s_new_p = pl.pallas_call(
        decoder_kernel,
        out_shape=(jax.ShapeDtypeStruct((T, Bp, Op), jnp.float32),
                   jax.ShapeDtypeStruct((2, Bp, Hdp), jnp.float32)),
        grid=(T,),
        in_specs=in_specs,
        out_specs=out_specs,
        scratch_shapes=[
            pltpu.VMEM((S, Bp, Hdp), jnp.float32),   # cached enc @ Wa_e
            pltpu.VMEM((2, Bp, Hdp), jnp.float32),   # hidden-state carry
        ],
        compiler_params=pltpu.CompilerParams(
            dimension_semantics=("arbitrary",)),
    )(dec_p, s_p, enc_p, *weights)

    return pre_p[:, :B, :O], s_new_p[:, :B, :Hd]


def decoder_forward(enc_p, weights, dec_input, s, *, B, F, Hd, O):
    """Single decode step (matches the PyTorch module's forward)."""
    pre, s_new = decoder_steps(enc_p, weights, dec_input[None], s,
                               B=B, F=F, Hd=Hd, O=O)
    return pre[0], s_new


# --------------------------------------------------------------------------- #
# Pure-JAX reference (original unpadded parameters) for correctness checking
# --------------------------------------------------------------------------- #
def decoder_ref(enc, dec_in, s, P):
    Hd = s.shape[-1]
    s1 = s[1]
    s_proj = s1 @ P["wa_s"].T
    e_proj = jnp.einsum("sbe,he->sbh", enc, P["wa_e"])
    energy = jnp.tanh(e_proj + s_proj[None])
    logits = jnp.sum(energy * P["v"][None], axis=-1)        # (S, B)
    att = jax.nn.softmax(logits, axis=0)
    ctx = jnp.sum(att[:, :, None] * enc, axis=0)            # (B, He)
    fc_out = ctx @ P["wfc_c"].T + dec_in[0] @ P["wfc_x"].T + P["bfc"]

    def step(x, h, wih, whh, b):
        g = x @ wih.T + h @ whh.T + b
        i = jax.nn.sigmoid(g[:, :Hd])
        gg = jnp.tanh(g[:, 2 * Hd:3 * Hd])
        o = jax.nn.sigmoid(g[:, 3 * Hd:])
        c = i * gg
        return o * jnp.tanh(c)

    h0 = step(fc_out, s[0], P["wih0"], P["whh0"], P["b0"])
    h1 = step(h0, s1, P["wih1"], P["whh1"], P["b1"])
    pre = h1 @ P["wout"].T + P["bout"]
    return pre, jnp.stack([h0, h1])


def make_params(key, F, He, Hd, O):
    ks = jax.random.split(key, 14)

    def init(k, shape, scale=0.1):
        return scale * jax.random.normal(k, shape, dtype=jnp.float32)

    return dict(
        wa_s=init(ks[0], (Hd, Hd)),
        wa_e=init(ks[1], (Hd, He)),
        v=init(ks[2], (1, Hd)),
        wfc_c=init(ks[3], (F, He)),
        wfc_x=init(ks[4], (F, F)),
        bfc=init(ks[5], (1, F)),
        wih0=init(ks[6], (4 * Hd, F)),
        whh0=init(ks[7], (4 * Hd, Hd)),
        b0=init(ks[8], (1, 4 * Hd)),
        wih1=init(ks[9], (4 * Hd, Hd)),
        whh1=init(ks[10], (4 * Hd, Hd)),
        b1=init(ks[11], (1, 4 * Hd)),
        wout=init(ks[12], (O, Hd)),
        bout=init(ks[13], (1, O)),
    )


if __name__ == "__main__":
    F, He, Hd, O = 8, 16, 16, 5      # in_features, enc_hid (= dec_hid), output_size
    S, B = 6, 2                      # seq_len, batch
    T = 4                            # fused decode steps for the rollout test

    key = jax.random.PRNGKey(0)
    k_enc, k_dec, k_s, k_p, k_roll = jax.random.split(key, 5)
    enc = jax.random.normal(k_enc, (S, B, He), dtype=jnp.float32)
    dec_in = jax.random.normal(k_dec, (1, B, F), dtype=jnp.float32)
    s = jax.random.normal(k_s, (2, B, Hd), dtype=jnp.float32)
    params = make_params(k_p, F, He, Hd, O)

    # one-time preparation (cached across all decode calls)
    weights = prepare_weights(params, F, He, Hd, O)
    enc_p = prepare_encoder(enc, He)

    # ---- single-step check (exactly the PyTorch module's forward) -----------
    pre, s_new = decoder_forward(enc_p, weights, dec_in, s, B=B, F=F, Hd=Hd, O=O)
    jax.block_until_ready((pre, s_new))
    pre_r, s_r = decoder_ref(enc, dec_in, s, params)
    assert pre.shape == (B, O) and s_new.shape == (2, B, Hd)
    assert jnp.allclose(pre, pre_r, atol=1e-2, rtol=1e-2)
    assert jnp.allclose(s_new, s_r, atol=1e-2, rtol=1e-2)

    # ---- fused multi-step rollout check (weights/enc resident across grid) ---
    dec_steps = jax.random.normal(k_roll, (T, 1, B, F), dtype=jnp.float32)
    pre_all, s_final = decoder_steps(enc_p, weights, dec_steps, s,
                                     B=B, F=F, Hd=Hd, O=O)
    jax.block_until_ready((pre_all, s_final))

    s_cur = s
    pres_r = []
    for t in range(T):
        p_t, s_cur = decoder_ref(enc, dec_steps[t], s_cur, params)
        pres_r.append(p_t)
    pre_all_r = jnp.stack(pres_r)
    assert pre_all.shape == (T, B, O) and s_final.shape == (2, B, Hd)
    assert jnp.allclose(pre_all, pre_all_r, atol=1e-2, rtol=1e-2)
    assert jnp.allclose(s_final, s_cur, atol=1e-2, rtol=1e-2)

    print("KERNEL_OK")
</pallas_src>

<mosaic_0001>
module attributes {stable_mosaic.version = 11 : i64} {
  func.func @decoder_kernel(%arg0: i32, %arg1: memref<1x8x128xf32, #tpu.memory_space<vmem>>, %arg2: memref<2x8x128xf32, #tpu.memory_space<vmem>>, %arg3: memref<6x8x128xf32, #tpu.memory_space<vmem>>, %arg4: memref<128x128xbf16, #tpu.memory_space<vmem>>, %arg5: memref<128x128xbf16, #tpu.memory_space<vmem>>, %arg6: memref<1x128xf32, #tpu.memory_space<vmem>>, %arg7: memref<256x128xbf16, #tpu.memory_space<vmem>>, %arg8: memref<1x128xf32, #tpu.memory_space<vmem>>, %arg9: memref<256x384xbf16, #tpu.memory_space<vmem>>, %arg10: memref<1x384xf32, #tpu.memory_space<vmem>>, %arg11: memref<256x384xbf16, #tpu.memory_space<vmem>>, %arg12: memref<1x384xf32, #tpu.memory_space<vmem>>, %arg13: memref<128x128xbf16, #tpu.memory_space<vmem>>, %arg14: memref<1x128xf32, #tpu.memory_space<vmem>>, %arg15: memref<1x8x128xf32, #tpu.memory_space<vmem>>, %arg16: memref<2x8x128xf32, #tpu.memory_space<vmem>>, %arg17: memref<6x8x128xf32, #tpu.memory_space<vmem>>, %arg18: memref<2x8x128xf32, #tpu.memory_space<vmem>>) attributes {dimension_semantics = [#tpu.dimension_semantics<arbitrary>], iteration_bounds = array<i64: 1>, scalar_prefetch = 0 : i64, scratch_operands = 2 : i64, tpu.core_type = #tpu.core_type<tc>, window_params = [{transform_indices = @transform_0, window_bounds = array<i64: 1, 8, 128>}, {pipeline_mode = #tpu.pipeline_mode<synchronous>, transform_indices = @transform_1, window_bounds = array<i64: 2, 8, 128>}, {pipeline_mode = #tpu.pipeline_mode<synchronous>, transform_indices = @transform_2, window_bounds = array<i64: 6, 8, 128>}, {pipeline_mode = #tpu.pipeline_mode<synchronous>, transform_indices = @transform_3, window_bounds = array<i64: 128, 128>}, {pipeline_mode = #tpu.pipeline_mode<synchronous>, transform_indices = @transform_4, window_bounds = array<i64: 128, 128>}, {pipeline_mode = #tpu.pipeline_mode<synchronous>, transform_indices = @transform_5, window_bounds = array<i64: 1, 128>}, {pipeline_mode = #tpu.pipeline_mode<synchronous>, transform_indices = @transform_6, window_bounds = array<i64: 256, 128>}, {pipeline_mode = #tpu.pipeline_mode<synchronous>, transform_indices = @transform_7, window_bounds = array<i64: 1, 128>}, {pipeline_mode = #tpu.pipeline_mode<synchronous>, transform_indices = @transform_8, window_bounds = array<i64: 256, 384>}, {pipeline_mode = #tpu.pipeline_mode<synchronous>, transform_indices = @transform_9, window_bounds = array<i64: 1, 384>}, {pipeline_mode = #tpu.pipeline_mode<synchronous>, transform_indices = @transform_10, window_bounds = array<i64: 256, 384>}, {pipeline_mode = #tpu.pipeline_mode<synchronous>, transform_indices = @transform_11, window_bounds = array<i64: 1, 384>}, {pipeline_mode = #tpu.pipeline_mode<synchronous>, transform_indices = @transform_12, window_bounds = array<i64: 128, 128>}, {pipeline_mode = #tpu.pipeline_mode<synchronous>, transform_indices = @transform_13, window_bounds = array<i64: 1, 128>}, {transform_indices = @transform_14, window_bounds = array<i64: 1, 8, 128>}, {pipeline_mode = #tpu.pipeline_mode<synchronous>, transform_indices = @transform_15, window_bounds = array<i64: 2, 8, 128>}]} {
    %c0_i32 = arith.constant 0 : i32
    %0 = arith.cmpi eq, %arg0, %c0_i32 : i32
    %1 = arith.extui %0 : i1 to i32
    %c0_i32_0 = arith.constant 0 : i32
    %2 = arith.cmpi ne, %1, %c0_i32_0 : i32
    scf.if %2 {
      %c0_61 = arith.constant 0 : index
      %c0_62 = arith.constant 0 : index
      %c0_63 = arith.constant 0 : index
      %113 = vector.load %arg2[%c0_61, %c0_62, %c0_63] : memref<2x8x128xf32, #tpu.memory_space<vmem>>, vector<2x8x128xf32>
      %c0_64 = arith.constant 0 : index
      %c0_65 = arith.constant 0 : index
      %c0_66 = arith.constant 0 : index
      %114 = vector.load %arg18[%c0_64, %c0_65, %c0_66] : memref<2x8x128xf32, #tpu.memory_space<vmem>>, vector<2x8x128xf32>
      tpu.vector_store %arg18[%c0_64, %c0_65, %c0_66], %113 {strides = array<i32>} : memref<2x8x128xf32, #tpu.memory_space<vmem>>, vector<2x8x128xf32>,
      %c0_67 = arith.constant 0 : index
      %c0_68 = arith.constant 0 : index
      %c0_69 = arith.constant 0 : index
      %115 = vector.load %arg3[%c0_67, %c0_68, %c0_69] : memref<6x8x128xf32, #tpu.memory_space<vmem>>, vector<6x8x128xf32>
      %116 = vector.shape_cast %115 : vector<6x8x128xf32> to vector<48x128xf32>
      %117 = arith.truncf %116 : vector<48x128xf32> to vector<48x128xbf16>
      %c0_70 = arith.constant 0 : index
      %c0_71 = arith.constant 0 : index
      %118 = vector.load %arg4[%c0_70, %c0_71] : memref<128x128xbf16, #tpu.memory_space<vmem>>, vector<128x128xbf16>
      %cst_72 = arith.constant dense<0.000000e+00> : vector<48x128xf32>
      %119 = tpu.matmul %117, %118, %cst_72 {dimension_numbers = #tpu.dot_dimension_numbers<[1], [0], [0], [1], [0, 0, 1, 1], [], []>} : vector<48x128xbf16>, vector<128x128xbf16>, vector<48x128xf32> -> vector<48x128xf32>
      %120 = vector.shape_cast %119 : vector<48x128xf32> to vector<6x8x128xf32>
      %c0_73 = arith.constant 0 : index
      %c0_74 = arith.constant 0 : index
      %c0_75 = arith.constant 0 : index
      %121 = vector.load %arg17[%c0_73, %c0_74, %c0_75] : memref<6x8x128xf32, #tpu.memory_space<vmem>>, vector<6x8x128xf32>
      tpu.vector_store %arg17[%c0_73, %c0_74, %c0_75], %120 {strides = array<i32>} : memref<6x8x128xf32, #tpu.memory_space<vmem>>, vector<6x8x128xf32>,
    } else {
    }
    %c0 = arith.constant 0 : index
    %c0_1 = arith.constant 0 : index
    %c0_2 = arith.constant 0 : index
    %3 = vector.load %arg18[%c0, %c0_1, %c0_2] : memref<2x8x128xf32, #tpu.memory_space<vmem>>, vector<1x8x128xf32>
    %4 = vector.shape_cast %3 : vector<1x8x128xf32> to vector<8x128xf32>
    %c1 = arith.constant 1 : index
    %c0_3 = arith.constant 0 : index
    %c0_4 = arith.constant 0 : index
    %5 = vector.load %arg18[%c1, %c0_3, %c0_4] : memref<2x8x128xf32, #tpu.memory_space<vmem>>, vector<1x8x128xf32>
    %6 = vector.shape_cast %5 : vector<1x8x128xf32> to vector<8x128xf32>
    %c0_5 = arith.constant 0 : index
    %c0_6 = arith.constant 0 : index
    %c0_7 = arith.constant 0 : index
    %7 = vector.load %arg1[%c0_5, %c0_6, %c0_7] : memref<1x8x128xf32, #tpu.memory_space<vmem>>, vector<1x8x128xf32>
    %8 = vector.shape_cast %7 : vector<1x8x128xf32> to vector<8x128xf32>
    %c0_8 = arith.constant 0 : index
    %c0_9 = arith.constant 0 : index
    %c0_10 = arith.constant 0 : index
    %9 = vector.load %arg3[%c0_8, %c0_9, %c0_10] : memref<6x8x128xf32, #tpu.memory_space<vmem>>, vector<6x8x128xf32>
    %10 = arith.truncf %6 : vector<8x128xf32> to vector<8x128xbf16>
    %c0_11 = arith.constant 0 : index
    %c0_12 = arith.constant 0 : index
    %11 = vector.load %arg5[%c0_11, %c0_12] : memref<128x128xbf16, #tpu.memory_space<vmem>>, vector<128x128xbf16>
    %cst = arith.constant dense<0.000000e+00> : vector<8x128xf32>
    %12 = tpu.matmul %10, %11, %cst {dimension_numbers = #tpu.dot_dimension_numbers<[1], [0], [0], [1], [0, 0, 1, 1], [], []>} : vector<8x128xbf16>, vector<128x128xbf16>, vector<8x128xf32> -> vector<8x128xf32>
    %c0_13 = arith.constant 0 : index
    %c0_14 = arith.constant 0 : index
    %c0_15 = arith.constant 0 : index
    %13 = vector.load %arg17[%c0_13, %c0_14, %c0_15] : memref<6x8x128xf32, #tpu.memory_space<vmem>>, vector<6x8x128xf32>
    %14 = vector.shape_cast %12 : vector<8x128xf32> to vector<1x8x128xf32>
    %15 = vector.broadcast %14 : vector<1x8x128xf32> to vector<6x8x128xf32>
    %16 = arith.addf %13, %15 : vector<6x8x128xf32>
    %17 = math.tanh %16 : vector<6x8x128xf32>
    %c0_16 = arith.constant 0 : index
    %c0_17 = arith.constant 0 : index
    %18 = vector.load %arg6[%c0_16, %c0_17] : memref<1x128xf32, #tpu.memory_space<vmem>>, vector<1x128xf32>
    %19 = vector.shape_cast %18 : vector<1x128xf32> to vector<1x1x128xf32>
    %20 = vector.broadcast %19 : vector<1x1x128xf32> to vector<6x8x128xf32>
    %21 = arith.mulf %17, %20 : vector<6x8x128xf32>
    %cst_18 = arith.constant dense<0.000000e+00> : vector<6x8xf32>
    %22 = vector.multi_reduction <add>, %21, %cst_18 [2] : vector<6x8x128xf32> to vector<6x8xf32>
    %23 = vector.shape_cast %22 : vector<6x8xf32> to vector<6x8x1xf32>
    %cst_19 = arith.constant dense<0xFF800000> : vector<8x1xf32>
    %24 = vector.multi_reduction <maximumf>, %23, %cst_19 [0] : vector<6x8x1xf32> to vector<8x1xf32>
    %25 = vector.shape_cast %24 : vector<8x1xf32> to vector<1x8x1xf32>
    %26 = vector.broadcast %25 : vector<1x8x1xf32> to vector<6x8x1xf32>
    %27 = arith.subf %23, %26 : vector<6x8x1xf32>
    %28 = math.exp %27 : vector<6x8x1xf32>
    %cst_20 = arith.constant dense<0.000000e+00> : vector<8x1xf32>
    %29 = vector.multi_reduction <add>, %28, %cst_20 [0] : vector<6x8x1xf32> to vector<8x1xf32>
    %30 = vector.shape_cast %29 : vector<8x1xf32> to vector<1x8x1xf32>
    %31 = tpu.reciprocal %30 {approx = true} : vector<1x8x1xf32> -> vector<1x8x1xf32>
    %32 = vector.broadcast %31 : vector<1x8x1xf32> to vector<6x8x1xf32>
    %33 = arith.mulf %28, %32 : vector<6x8x1xf32>
    %34 = vector.broadcast %33 : vector<6x8x1xf32> to vector<6x8x128xf32>
    %35 = arith.mulf %34, %9 : vector<6x8x128xf32>
    %cst_21 = arith.constant dense<0.000000e+00> : vector<8x128xf32>
    %36 = vector.multi_reduction <add>, %35, %cst_21 [0] : vector<6x8x128xf32> to vector<8x128xf32>
    %37 = tpu.concatenate %36, %8 in 1 : vector<8x128xf32>, vector<8x128xf32> -> vector<8x256xf32>
    %38 = arith.truncf %37 : vector<8x256xf32> to vector<8x256xbf16>
    %c0_22 = arith.constant 0 : index
    %c0_23 = arith.constant 0 : index
    %39 = vector.load %arg7[%c0_22, %c0_23] : memref<256x128xbf16, #tpu.memory_space<vmem>>, vector<256x128xbf16>
    %cst_24 = arith.constant dense<0.000000e+00> : vector<8x128xf32>
    %40 = tpu.matmul %38, %39, %cst_24 {dimension_numbers = #tpu.dot_dimension_numbers<[1], [0], [0], [1], [0, 0, 1, 1], [], []>} : vector<8x256xbf16>, vector<256x128xbf16>, vector<8x128xf32> -> vector<8x128xf32>
    %c0_25 = arith.constant 0 : index
    %c0_26 = arith.constant 0 : index
    %41 = vector.load %arg8[%c0_25, %c0_26] : memref<1x128xf32, #tpu.memory_space<vmem>>, vector<1x128xf32>
    %42 = vector.broadcast %41 : vector<1x128xf32> to vector<8x128xf32>
    %43 = arith.addf %40, %42 : vector<8x128xf32>
    %44 = tpu.concatenate %43, %4 in 1 : vector<8x128xf32>, vector<8x128xf32> -> vector<8x256xf32>
    %45 = arith.truncf %44 : vector<8x256xf32> to vector<8x256xbf16>
    %c0_27 = arith.constant 0 : index
    %c0_28 = arith.constant 0 : index
    %46 = vector.load %arg9[%c0_27, %c0_28] : memref<256x384xbf16, #tpu.memory_space<vmem>>, vector<256x384xbf16>
    %cst_29 = arith.constant dense<0.000000e+00> : vector<8x384xf32>
    %47 = tpu.matmul %45, %46, %cst_29 {dimension_numbers = #tpu.dot_dimension_numbers<[1], [0], [0], [1], [0, 0, 1, 1], [], []>} : vector<8x256xbf16>, vector<256x384xbf16>, vector<8x384xf32> -> vector<8x384xf32>
    %c0_30 = arith.constant 0 : index
    %c0_31 = arith.constant 0 : index
    %48 = vector.load %arg10[%c0_30, %c0_31] : memref<1x384xf32, #tpu.memory_space<vmem>>, vector<1x384xf32>
    %49 = vector.broadcast %48 : vector<1x384xf32> to vector<8x384xf32>
    %50 = arith.addf %47, %49 : vector<8x384xf32>
    %51 = vector.extract_strided_slice %50 {offsets = [0, 0], sizes = [8, 128], strides = [1, 1]} : vector<8x384xf32> to vector<8x128xf32>
    %52 = arith.negf %51 : vector<8x128xf32>
    %53 = math.exp %52 : vector<8x128xf32>
    %cst_32 = arith.constant 1.000000e+00 : f32
    %54 = vector.broadcast %cst_32 : f32 to vector<8x128xf32>
    %55 = arith.addf %54, %53 : vector<8x128xf32>
    %56 = arith.divf %54, %55 : vector<8x128xf32>
    %57 = vector.extract_strided_slice %50 {offsets = [0, 128], sizes = [8, 128], strides = [1, 1]} : vector<8x384xf32> to vector<8x128xf32>
    %58 = math.tanh %57 : vector<8x128xf32>
    %59 = arith.mulf %56, %58 : vector<8x128xf32>
    %60 = vector.extract_strided_slice %50 {offsets = [0, 256], sizes = [8, 128], strides = [1, 1]} : vector<8x384xf32> to vector<8x128xf32>
    %61 = arith.negf %60 : vector<8x128xf32>
    %62 = math.exp %61 : vector<8x128xf32>
    %cst_33 = arith.constant 1.000000e+00 : f32
    %63 = vector.broadcast %cst_33 : f32 to vector<8x128xf32>
    %64 = arith.addf %63, %62 : vector<8x128xf32>
    %65 = arith.divf %63, %64 : vector<8x128xf32>
    %66 = math.tanh %59 : vector<8x128xf32>
    %67 = arith.mulf %65, %66 : vector<8x128xf32>
    %68 = tpu.concatenate %67, %6 in 1 : vector<8x128xf32>, vector<8x128xf32> -> vector<8x256xf32>
    %69 = arith.truncf %68 : vector<8x256xf32> to vector<8x256xbf16>
    %c0_34 = arith.constant 0 : index
    %c0_35 = arith.constant 0 : index
    %70 = vector.load %arg11[%c0_34, %c0_35] : memref<256x384xbf16, #tpu.memory_space<vmem>>, vector<256x384xbf16>
    %cst_36 = arith.constant dense<0.000000e+00> : vector<8x384xf32>
    %71 = tpu.matmul %69, %70, %cst_36 {dimension_numbers = #tpu.dot_dimension_numbers<[1], [0], [0], [1], [0, 0, 1, 1], [], []>} : vector<8x256xbf16>, vector<256x384xbf16>, vector<8x384xf32> -> vector<8x384xf32>
    %c0_37 = arith.constant 0 : index
    %c0_38 = arith.constant 0 : index
    %72 = vector.load %arg12[%c0_37, %c0_38] : memref<1x384xf32, #tpu.memory_space<vmem>>, vector<1x384xf32>
    %73 = vector.broadcast %72 : vector<1x384xf32> to vector<8x384xf32>
    %74 = arith.addf %71, %73 : vector<8x384xf32>
    %75 = vector.extract_strided_slice %74 {offsets = [0, 0], sizes = [8, 128], strides = [1, 1]} : vector<8x384xf32> to vector<8x128xf32>
    %76 = arith.negf %75 : vector<8x128xf32>
    %77 = math.exp %76 : vector<8x128xf32>
    %cst_39 = arith.constant 1.000000e+00 : f32
    %78 = vector.broadcast %cst_39 : f32 to vector<8x128xf32>
    %79 = arith.addf %78, %77 : vector<8x128xf32>
    %80 = arith.divf %78, %79 : vector<8x128xf32>
    %81 = vector.extract_strided_slice %74 {offsets = [0, 128], sizes = [8, 128], strides = [1, 1]} : vector<8x384xf32> to vector<8x128xf32>
    %82 = math.tanh %81 : vector<8x128xf32>
    %83 = arith.mulf %80, %82 : vector<8x128xf32>
    %84 = vector.extract_strided_slice %74 {offsets = [0, 256], sizes = [8, 128], strides = [1, 1]} : vector<8x384xf32> to vector<8x128xf32>
    %85 = arith.negf %84 : vector<8x128xf32>
    %86 = math.exp %85 : vector<8x128xf32>
    %cst_40 = arith.constant 1.000000e+00 : f32
    %87 = vector.broadcast %cst_40 : f32 to vector<8x128xf32>
    %88 = arith.addf %87, %86 : vector<8x128xf32>
    %89 = arith.divf %87, %88 : vector<8x128xf32>
    %90 = math.tanh %83 : vector<8x128xf32>
    %91 = arith.mulf %89, %90 : vector<8x128xf32>
    %92 = arith.truncf %91 : vector<8x128xf32> to vector<8x128xbf16>
    %c0_41 = arith.constant 0 : index
    %c0_42 = arith.constant 0 : index
    %93 = vector.load %arg13[%c0_41, %c0_42] : memref<128x128xbf16, #tpu.memory_space<vmem>>, vector<128x128xbf16>
    %cst_43 = arith.constant dense<0.000000e+00> : vector<8x128xf32>
    %94 = tpu.matmul %92, %93, %cst_43 {dimension_numbers = #tpu.dot_dimension_numbers<[1], [0], [0], [1], [0, 0, 1, 1], [], []>} : vector<8x128xbf16>, vector<128x128xbf16>, vector<8x128xf32> -> vector<8x128xf32>
    %c0_44 = arith.constant 0 : index
    %c0_45 = arith.constant 0 : index
    %95 = vector.load %arg14[%c0_44, %c0_45] : memref<1x128xf32, #tpu.memory_space<vmem>>, vector<1x128xf32>
    %96 = vector.broadcast %95 : vector<1x128xf32> to vector<8x128xf32>
    %97 = arith.addf %94, %96 : vector<8x128xf32>
    %c0_46 = arith.constant 0 : index
    %c0_47 = arith.constant 0 : index
    %c0_48 = arith.constant 0 : index
    %98 = vector.load %arg15[%c0_46, %c0_47, %c0_48] : memref<1x8x128xf32, #tpu.memory_space<vmem>>, vector<1x8x128xf32>
    %99 = vector.shape_cast %98 : vector<1x8x128xf32> to vector<8x128xf32>
    %100 = vector.shape_cast %97 : vector<8x128xf32> to vector<1x8x128xf32>
    tpu.vector_store %arg15[%c0_46, %c0_47, %c0_48], %100 {strides = array<i32>} : memref<1x8x128xf32, #tpu.memory_space<vmem>>, vector<1x8x128xf32>,
    %c0_49 = arith.constant 0 : index
    %c0_50 = arith.constant 0 : index
    %c0_51 = arith.constant 0 : index
    %101 = vector.load %arg18[%c0_49, %c0_50, %c0_51] : memref<2x8x128xf32, #tpu.memory_space<vmem>>, vector<1x8x128xf32>
    %102 = vector.shape_cast %101 : vector<1x8x128xf32> to vector<8x128xf32>
    %103 = vector.shape_cast %67 : vector<8x128xf32> to vector<1x8x128xf32>
    tpu.vector_store %arg18[%c0_49, %c0_50, %c0_51], %103 {strides = array<i32>} : memref<2x8x128xf32, #tpu.memory_space<vmem>>, vector<1x8x128xf32>,
    %c1_52 = arith.constant 1 : index
    %c0_53 = arith.constant 0 : index
    %c0_54 = arith.constant 0 : index
    %104 = vector.load %arg18[%c1_52, %c0_53, %c0_54] : memref<2x8x128xf32, #tpu.memory_space<vmem>>, vector<1x8x128xf32>
    %105 = vector.shape_cast %104 : vector<1x8x128xf32> to vector<8x128xf32>
    %106 = vector.shape_cast %91 : vector<8x128xf32> to vector<1x8x128xf32>
    tpu.vector_store %arg18[%c1_52, %c0_53, %c0_54], %106 {strides = array<i32>} : memref<2x8x128xf32, #tpu.memory_space<vmem>>, vector<1x8x128xf32>,
    %c0_55 = arith.constant 0 : index
    %c0_56 = arith.constant 0 : index
    %c0_57 = arith.constant 0 : index
    %107 = vector.load %arg16[%c0_55, %c0_56, %c0_57] : memref<2x8x128xf32, #tpu.memory_space<vmem>>, vector<1x8x128xf32>
    %108 = vector.shape_cast %107 : vector<1x8x128xf32> to vector<8x128xf32>
    %109 = vector.shape_cast %67 : vector<8x128xf32> to vector<1x8x128xf32>
    tpu.vector_store %arg16[%c0_55, %c0_56, %c0_57], %109 {strides = array<i32>} : memref<2x8x128xf32, #tpu.memory_space<vmem>>, vector<1x8x128xf32>,
    %c1_58 = arith.constant 1 : index
    %c0_59 = arith.constant 0 : index
    %c0_60 = arith.constant 0 : index
    %110 = vector.load %arg16[%c1_58, %c0_59, %c0_60] : memref<2x8x128xf32, #tpu.memory_space<vmem>>, vector<1x8x128xf32>
    %111 = vector.shape_cast %110 : vector<1x8x128xf32> to vector<8x128xf32>
    %112 = vector.shape_cast %91 : vector<8x128xf32> to vector<1x8x128xf32>
    tpu.vector_store %arg16[%c1_58, %c0_59, %c0_60], %112 {strides = array<i32>} : memref<2x8x128xf32, #tpu.memory_space<vmem>>, vector<1x8x128xf32>,
    return
  }
  func.func @transform_0(%arg0: i32) -> (i32, i32, i32) {
    %c0_i32 = arith.constant 0 : i32
    %c0_i32_0 = arith.constant 0 : i32
    %c0_i32_1 = arith.constant 0 : i32
    return %arg0, %c0_i32, %c0_i32_0 : i32, i32, i32
  }
  func.func @transform_1(%arg0: i32) -> (i32, i32, i32) {
    %c0_i32 = arith.constant 0 : i32
    %c0_i32_0 = arith.constant 0 : i32
    %c0_i32_1 = arith.constant 0 : i32
    %c0_i32_2 = arith.constant 0 : i32
    return %c0_i32, %c0_i32_0, %c0_i32_1 : i32, i32, i32
  }
  func.func @transform_2(%arg0: i32) -> (i32, i32, i32) {
    %c0_i32 = arith.constant 0 : i32
    %c0_i32_0 = arith.constant 0 : i32
    %c0_i32_1 = arith.constant 0 : i32
    %c0_i32_2 = arith.constant 0 : i32
    return %c0_i32, %c0_i32_0, %c0_i32_1 : i32, i32, i32
  }
  func.func @transform_3(%arg0: i32) -> (i32, i32) {
    %c0_i32 = arith.constant 0 : i32
    %c0_i32_0 = arith.constant 0 : i32
    %c0_i32_1 = arith.constant 0 : i32
    return %c0_i32, %c0_i32_0 : i32, i32
  }
  func.func @transform_4(%arg0: i32) -> (i32, i32) {
    %c0_i32 = arith.constant 0 : i32
    %c0_i32_0 = arith.constant 0 : i32
    %c0_i32_1 = arith.constant 0 : i32
    return %c0_i32, %c0_i32_0 : i32, i32
  }
  func.func @transform_5(%arg0: i32) -> (i32, i32) {
    %c0_i32 = arith.constant 0 : i32
    %c0_i32_0 = arith.constant 0 : i32
    %c0_i32_1 = arith.constant 0 : i32
    return %c0_i32, %c0_i32_0 : i32, i32
  }
  func.func @transform_6(%arg0: i32) -> (i32, i32) {
    %c0_i32 = arith.constant 0 : i32
    %c0_i32_0 = arith.constant 0 : i32
    %c0_i32_1 = arith.constant 0 : i32
    return %c0_i32, %c0_i32_0 : i32, i32
  }
  func.func @transform_7(%arg0: i32) -> (i32, i32) {
    %c0_i32 = arith.constant 0 : i32
    %c0_i32_0 = arith.constant 0 : i32
    %c0_i32_1 = arith.constant 0 : i32
    return %c0_i32, %c0_i32_0 : i32, i32
  }
  func.func @transform_8(%arg0: i32) -> (i32, i32) {
    %c0_i32 = arith.constant 0 : i32
    %c0_i32_0 = arith.constant 0 : i32
    %c0_i32_1 = arith.constant 0 : i32
    return %c0_i32, %c0_i32_0 : i32, i32
  }
  func.func @transform_9(%arg0: i32) -> (i32, i32) {
    %c0_i32 = arith.constant 0 : i32
    %c0_i32_0 = arith.constant 0 : i32
    %c0_i32_1 = arith.constant 0 : i32
    return %c0_i32, %c0_i32_0 : i32, i32
  }
  func.func @transform_10(%arg0: i32) -> (i32, i32) {
    %c0_i32 = arith.constant 0 : i32
    %c0_i32_0 = arith.constant 0 : i32
    %c0_i32_1 = arith.constant 0 : i32
    return %c0_i32, %c0_i32_0 : i32, i32
  }
  func.func @transform_11(%arg0: i32) -> (i32, i32) {
    %c0_i32 = arith.constant 0 : i32
    %c0_i32_0 = arith.constant 0 : i32
    %c0_i32_1 = arith.constant 0 : i32
    return %c0_i32, %c0_i32_0 : i32, i32
  }
  func.func @transform_12(%arg0: i32) -> (i32, i32) {
    %c0_i32 = arith.constant 0 : i32
    %c0_i32_0 = arith.constant 0 : i32
    %c0_i32_1 = arith.constant 0 : i32
    return %c0_i32, %c0_i32_0 : i32, i32
  }
  func.func @transform_13(%arg0: i32) -> (i32, i32) {
    %c0_i32 = arith.constant 0 : i32
    %c0_i32_0 = arith.constant 0 : i32
    %c0_i32_1 = arith.constant 0 : i32
    return %c0_i32, %c0_i32_0 : i32, i32
  }
  func.func @transform_14(%arg0: i32) -> (i32, i32, i32) {
    %c0_i32 = arith.constant 0 : i32
    %c0_i32_0 = arith.constant 0 : i32
    %c0_i32_1 = arith.constant 0 : i32
    return %arg0, %c0_i32, %c0_i32_0 : i32, i32, i32
  }
  func.func @transform_15(%arg0: i32) -> (i32, i32, i32) {
    %c0_i32 = arith.constant 0 : i32
    %c0_i32_0 = arith.constant 0 : i32
    %c0_i32_1 = arith.constant 0 : i32
    %c0_i32_2 = arith.constant 0 : i32
    return %c0_i32, %c0_i32_0, %c0_i32_1 : i32, i32, i32
  }
}

</mosaic_0001>

<llo_original>
// kernel: decoder_steps.1
$region0: #{decoder_steps.1}
  #allocation0 [shape = 'u32[]', space=smem, size = 0x4, offset = 0x4, fixed_abs, tag = 'smem constant byte address 0x4 - core index']
  #allocation1 [shape = 'u32[144,128]{1,0:T(1,128)}', space=vmem, size = 0x12000, scoped, tag = 'internal scratch']
  #allocation2 [shape = 'f32[6,8,128]{2,1,0:T(8,128)}', space=vmem, size = 0x6000, scoped, tag = 'scratch operand']
  #allocation3 [shape = 'f32[2,8,128]{2,1,0:T(8,128)}', space=vmem, size = 0x2000, scoped, tag = 'scratch operand']
  %s0 = inlined_call_operand.vmem [shape: f32[1,8,128], index: 0, kind: input, shape index: {}]
  %s1 = inlined_call_operand.vmem [shape: f32[2,8,128], index: 1, kind: input, shape index: {}]
  %s2 = inlined_call_operand.hbm [shape: f32[6,8,128], index: 2, kind: input, shape index: {}]
  %s3 = inlined_call_operand.hbm [shape: bf16[128,128], index: 3, kind: input, shape index: {}]
  %s4 = inlined_call_operand.hbm [shape: bf16[128,128], index: 4, kind: input, shape index: {}]
  %s5 = inlined_call_operand.vmem [shape: f32[1,128], index: 5, kind: input, shape index: {}]
  %s6 = inlined_call_operand.hbm [shape: bf16[256,128], index: 6, kind: input, shape index: {}]
  %s7 = inlined_call_operand.vmem [shape: f32[1,128], index: 7, kind: input, shape index: {}]
  %s8 = inlined_call_operand.hbm [shape: bf16[256,384], index: 8, kind: input, shape index: {}]
  %s9 = inlined_call_operand.vmem [shape: f32[1,384], index: 9, kind: input, shape index: {}]
  %s10 = inlined_call_operand.hbm [shape: bf16[256,384], index: 10, kind: input, shape index: {}]
  %s11 = inlined_call_operand.vmem [shape: f32[1,384], index: 11, kind: input, shape index: {}]
  %s12 = inlined_call_operand.hbm [shape: bf16[128,128], index: 12, kind: input, shape index: {}]
  %s13 = inlined_call_operand.vmem [shape: f32[1,128], index: 13, kind: input, shape index: {}]
  %s14 = inlined_call_operand.vmem [shape: f32[1,8,128], index: 14, kind: output, shape index: {0}]
  %s15 = inlined_call_operand.vmem [shape: f32[2,8,128], index: 15, kind: output, shape index: {1}]
  %16 = xla_tuple %s14, %s15
  %s17 = sld [smem:[#allocation0]]
  $region106: #{decoder_steps.1} parent=0
    _
  %s19 = ssub.s32 1, %s17
  %s20 = scalar_select 0, %s19, %s17
  $region1: #{decoder_steps.1} parent=0
    #allocation4 [shape = 'u8[24576]{0}', space=vmem, size = 0x6000, scoped, tag = 'input window, operand 2, single buffered']
    #allocation5 [shape = 's32[1]{0}', space=sflag, size = 0x4, scoped, tag = 'scoped memory for decoder_steps.1']
    #allocation6 [shape = 'u8[32768]{0}', space=vmem, size = 0x8000, scoped, tag = 'input window, operand 3, single buffered']
    #allocation7 [shape = 's32[1]{0}', space=sflag, size = 0x4, scoped, tag = 'scoped memory for decoder_steps.1']
    #allocation8 [shape = 'u8[32768]{0}', space=vmem, size = 0x8000, scoped, tag = 'input window, operand 4, single buffered']
    #allocation9 [shape = 'u8[65536]{0}', space=vmem, size = 0x10000, scoped, tag = 'input window, operand 6, single buffered']
    #allocation10 [shape = 's32[1]{0}', space=sflag, size = 0x4, scoped, tag = 'scoped memory for decoder_steps.1']
    #allocation11 [shape = 'u8[196608]{0}', space=vmem, size = 0x30000, scoped, tag = 'input window, operand 8, single buffered']
    #allocation12 [shape = 'u8[196608]{0}', space=vmem, size = 0x30000, scoped, tag = 'input window, operand 10, single buffered']
    #allocation13 [shape = 's32[1]{0}', space=sflag, size = 0x4, scoped, tag = 'scoped memory for decoder_steps.1']
    #allocation14 [shape = 'u8[32768]{0}', space=vmem, size = 0x8000, scoped, tag = 'input window, operand 12, single buffered']
    %21 = vsyncpa [#allocation5], 0
    %22 = vsyncpa [#allocation7], 0
    %23 = vsyncpa [#allocation10], 0
    %24 = vsyncpa [#allocation13], 0
    // Predicated region
    $region2: #{decoder_steps.1} parent=1 // pred_check
      _
    $region3: #{decoder_steps.1} parent=1 // pred_check_branch
      %26 = sbr.rel (0) target = $region5
    $region4: #{decoder_steps.1} parent=1 // pred_region
      _
    $region5: #{decoder_steps.1} parent=1 // pred_fallthru
      _
    // Predicated region
    $region6: #{decoder_steps.1} parent=1 // pred_check
      _
    $region7: #{decoder_steps.1} parent=1 // pred_check_branch
      %28 = sbr.rel (0) target = $region9
    $region8: #{decoder_steps.1} parent=1 // pred_region
      _
    $region9: #{decoder_steps.1} parent=1 // pred_fallthru
      _
    // Predicated region
    $region10: #{decoder_steps.1} parent=1 // pred_check
      _
    $region11: #{decoder_steps.1} parent=1 // pred_check_branch
      %30 = sbr.rel (0) target = $region13
    $region12: #{decoder_steps.1} parent=1 // pred_region
      %s32 = ssub.s32 768, 768
      %33 = vsyncadd [#allocation5], %s32
      %s34 = sshll.u32 [#allocation4], 4
      %s35 = int_to_ptr.vmem [resolvable:$true] %s34
      %40 = dma.hbm_to_vmem [thread:$0]  %s2, 768, %s35, [#allocation5], 128, 128, 8
    $region13: #{decoder_steps.1} parent=1 // pred_fallthru
      _
    // Predicated region
    $region14: #{decoder_steps.1} parent=1 // pred_check
      _
    $region15: #{decoder_steps.1} parent=1 // pred_check_branch
      %42 = sbr.rel (0) target = $region17
    $region16: #{decoder_steps.1} parent=1 // pred_region
      %s44 = ssub.s32 1024, 1024
      %45 = vsyncadd [#allocation7], %s44
      %s46 = sshll.u32 [#allocation6], 4
      %s47 = int_to_ptr.vmem [resolvable:$true] %s46
      %52 = dma.hbm_to_vmem [thread:$0]  %s3, 1024, %s47, [#allocation7], 64, 64, 4
    $region17: #{decoder_steps.1} parent=1 // pred_fallthru
      _
    // Predicated region
    $region18: #{decoder_steps.1} parent=1 // pred_check
      _
    $region19: #{decoder_steps.1} parent=1 // pred_check_branch
      %54 = sbr.rel (0) target = $region21
    $region20: #{decoder_steps.1} parent=1 // pred_region
      %s56 = ssub.s32 1024, 1024
      %57 = vsyncadd [#allocation7], %s56
      %s58 = sshll.u32 [#allocation8], 4
      %s59 = int_to_ptr.vmem [resolvable:$true] %s58
      %64 = dma.hbm_to_vmem [thread:$0]  %s4, 1024, %s59, [#allocation7], 64, 64, 4
    $region21: #{decoder_steps.1} parent=1 // pred_fallthru
      _
    // Predicated region
    $region22: #{decoder_steps.1} parent=1 // pred_check
      _
    $region23: #{decoder_steps.1} parent=1 // pred_check_branch
      %66 = sbr.rel (0) target = $region25
    $region24: #{decoder_steps.1} parent=1 // pred_region
      _
    $region25: #{decoder_steps.1} parent=1 // pred_fallthru
      _
    // Predicated region
    $region26: #{decoder_steps.1} parent=1 // pred_check
      _
    $region27: #{decoder_steps.1} parent=1 // pred_check_branch
      %68 = sbr.rel (0) target = $region29
    $region28: #{decoder_steps.1} parent=1 // pred_region
      %s70 = ssub.s32 2048, 2048
      %71 = vsyncadd [#allocation10], %s70
      %s72 = sshll.u32 [#allocation9], 4
      %s73 = int_to_ptr.vmem [resolvable:$true] %s72
      %78 = dma.hbm_to_vmem [thread:$0]  %s6, 2048, %s73, [#allocation10], 64, 64, 4
    $region29: #{decoder_steps.1} parent=1 // pred_fallthru
      _
    // Predicated region
    $region30: #{decoder_steps.1} parent=1 // pred_check
      _
    $region31: #{decoder_steps.1} parent=1 // pred_check_branch
      %80 = sbr.rel (0) target = $region33
    $region32: #{decoder_steps.1} parent=1 // pred_region
      _
    $region33: #{decoder_steps.1} parent=1 // pred_fallthru
      _
    // Predicated region
    $region34: #{decoder_steps.1} parent=1 // pred_check
      _
    $region35: #{decoder_steps.1} parent=1 // pred_check_branch
      %82 = sbr.rel (0) target = $region37
    $region36: #{decoder_steps.1} parent=1 // pred_region
      %s84 = ssub.s32 6144, 6144
      %85 = vsyncadd [#allocation10], %s84
      %s86 = sshll.u32 [#allocation11], 4
      %s87 = int_to_ptr.vmem [resolvable:$true] %s86
      %92 = dma.hbm_to_vmem [thread:$0]  %s8, 6144, %s87, [#allocation10], 192, 192, 12
    $region37: #{decoder_steps.1} parent=1 // pred_fallthru
      _
    // Predicated region
    $region38: #{decoder_steps.1} parent=1 // pred_check
      _
    $region39: #{decoder_steps.1} parent=1 // pred_check_branch
      %94 = sbr.rel (0) target = $region41
    $region40: #{decoder_steps.1} parent=1 // pred_region
      _
    $region41: #{decoder_steps.1} parent=1 // pred_fallthru
      _
    // Predicated region
    $region42: #{decoder_steps.1} parent=1 // pred_check
      _
    $region43: #{decoder_steps.1} parent=1 // pred_check_branch
      %96 = sbr.rel (0) target = $region45
    $region44: #{decoder_steps.1} parent=1 // pred_region
      %s98 = ssub.s32 6144, 6144
      %99 = vsyncadd [#allocation13], %s98
      %s100 = sshll.u32 [#allocation12], 4
      %s101 = int_to_ptr.vmem [resolvable:$true] %s100
      %106 = dma.hbm_to_vmem [thread:$0]  %s10, 6144, %s101, [#allocation13], 192, 192, 12
    $region45: #{decoder_steps.1} parent=1 // pred_fallthru
      _
    // Predicated region
    $region46: #{decoder_steps.1} parent=1 // pred_check
      _
    $region47: #{decoder_steps.1} parent=1 // pred_check_branch
      %108 = sbr.rel (0) target = $region49
    $region48: #{decoder_steps.1} parent=1 // pred_region
      _
    $region49: #{decoder_steps.1} parent=1 // pred_fallthru
      _
    // Predicated region
    $region50: #{decoder_steps.1} parent=1 // pred_check
      _
    $region51: #{decoder_steps.1} parent=1 // pred_check_branch
      %110 = sbr.rel (0) target = $region53
    $region52: #{decoder_steps.1} parent=1 // pred_region
      %s112 = ssub.s32 1024, 1024
      %113 = vsyncadd [#allocation13], %s112
      %s114 = sshll.u32 [#allocation14], 4
      %s115 = int_to_ptr.vmem [resolvable:$true] %s114
      %120 = dma.hbm_to_vmem [thread:$0]  %s12, 1024, %s115, [#allocation13], 64, 64, 4
    $region53: #{decoder_steps.1} parent=1 // pred_fallthru
      _
    // Predicated region
    $region54: #{decoder_steps.1} parent=1 // pred_check
      _
    $region55: #{decoder_steps.1} parent=1 // pred_check_branch
      %122 = sbr.rel (0) target = $region57
    $region56: #{decoder_steps.1} parent=1 // pred_region
      _
    $region57: #{decoder_steps.1} parent=1 // pred_fallthru
      _
    // Predicated region
    $region58: #{decoder_steps.1} parent=1 // pred_check
      _
    $region59: #{decoder_steps.1} parent=1 // pred_check_branch
      %124 = sbr.rel (0) target = $region61
    $region60: #{decoder_steps.1} parent=1 // pred_region
      %125 = dma.done [#allocation5], 768
    $region61: #{decoder_steps.1} parent=1 // pred_fallthru
      _
    // Predicated region
    $region62: #{decoder_steps.1} parent=1 // pred_check
      _
    $region63: #{decoder_steps.1} parent=1 // pred_check_branch
      %127 = sbr.rel (0) target = $region65
    $region64: #{decoder_steps.1} parent=1 // pred_region
      %128 = dma.done [#allocation7], 1024
    $region65: #{decoder_steps.1} parent=1 // pred_fallthru
      _
    // Predicated region
    $region66: #{decoder_steps.1} parent=1 // pred_check
      _
    $region67: #{decoder_steps.1} parent=1 // pred_check_branch
      %130 = sbr.rel (0) target = $region69
    $region68: #{decoder_steps.1} parent=1 // pred_region
      %131 = dma.done [#allocation7], 1024
    $region69: #{decoder_steps.1} parent=1 // pred_fallthru
      _
    // Predicated region
    $region70: #{decoder_steps.1} parent=1 // pred_check
      _
    $region71: #{decoder_steps.1} parent=1 // pred_check_branch
      %133 = sbr.rel (0) target = $region73
    $region72: #{decoder_steps.1} parent=1 // pred_region
      %134 = dma.done [#allocation10], 2048
    $region73: #{decoder_steps.1} parent=1 // pred_fallthru
      _
    // Predicated region
    $region74: #{decoder_steps.1} parent=1 // pred_check
      _
    $region75: #{decoder_steps.1} parent=1 // pred_check_branch
      %136 = sbr.rel (0) target = $region77
    $region76: #{decoder_steps.1} parent=1 // pred_region
      %137 = dma.done [#allocation10], 6144
    $region77: #{decoder_steps.1} parent=1 // pred_fallthru
      _
    // Predicated region
    $region78: #{decoder_steps.1} parent=1 // pred_check
      _
    $region79: #{decoder_steps.1} parent=1 // pred_check_branch
      %139 = sbr.rel (0) target = $region81
    $region80: #{decoder_steps.1} parent=1 // pred_region
      %140 = dma.done [#allocation13], 6144
    $region81: #{decoder_steps.1} parent=1 // pred_fallthru
      _
    // Predicated region
    $region82: #{decoder_steps.1} parent=1 // pred_check
      _
    $region83: #{decoder_steps.1} parent=1 // pred_check_branch
      %142 = sbr.rel (0) target = $region85
    $region84: #{decoder_steps.1} parent=1 // pred_region
      %143 = dma.done [#allocation13], 1024
    $region85: #{decoder_steps.1} parent=1 // pred_fallthru
      _
    %p145 = scmp.eq.s32.totalorder 0, 0
    // Predicated region
    $region86: #{decoder_steps.1} parent=1 // pred_check
      %p146 = pneg %p145
    $region87: #{decoder_steps.1} parent=1 // pred_check_branch
      %148 = sbr.rel (%p146) target = $region89
    $region88: #{decoder_steps.1} parent=1 // pred_region
      %v149 = vld [vmem:[%s1] sm:$0xff]
      %v150 = vld [vmem:[%s1 + $0x8] sm:$0xff]
      %151 = vst [vmem:[#allocation3] sm:$0xff] %v149
      %152 = vst [vmem:[#allocation3 + $0x8] sm:$0xff] %v150
      %v153 = vld [vmem:[#allocation4] sm:$0xff]
      %v154 = vld [vmem:[#allocation4 + $0x8] sm:$0xff]
      %v155 = vld [vmem:[#allocation4 + $0x10] sm:$0xff]
      %v156 = vld [vmem:[#allocation4 + $0x18] sm:$0xff]
      %v157 = vld [vmem:[#allocation4 + $0x20] sm:$0xff]
      %v158 = vld [vmem:[#allocation4 + $0x28] sm:$0xff]
      %v159 = vpack.c.bf16 %v154, %v153
      %v160 = vpack.c.bf16 %v156, %v155
      %v161 = vpack.c.bf16 %v158, %v157
      %v162 = vld [vmem:[#allocation6] sm:$0xf]
      %v163 = vld [vmem:[#allocation6 + $0x4] sm:$0xf]
      %v164 = vld [vmem:[#allocation6 + $0x8] sm:$0xf]
      %v165 = vld [vmem:[#allocation6 + $0xc] sm:$0xf]
      %v166 = vld [vmem:[#allocation6 + $0x10] sm:$0xf]
      %v167 = vld [vmem:[#allocation6 + $0x14] sm:$0xf]
      %v168 = vld [vmem:[#allocation6 + $0x18] sm:$0xf]
      %v169 = vld [vmem:[#allocation6 + $0x1c] sm:$0xf]
      %v170 = vld [vmem:[#allocation6 + $0x20] sm:$0xf]
      %v171 = vld [vmem:[#allocation6 + $0x24] sm:$0xf]
      %v172 = vld [vmem:[#allocation6 + $0x28] sm:$0xf]
      %v173 = vld [vmem:[#allocation6 + $0x2c] sm:$0xf]
      %v174 = vld [vmem:[#allocation6 + $0x30] sm:$0xf]
      %v175 = vld [vmem:[#allocation6 + $0x34] sm:$0xf]
      %v176 = vld [vmem:[#allocation6 + $0x38] sm:$0xf]
      %v177 = vld [vmem:[#allocation6 + $0x3c] sm:$0xf]
      %v194 = vunpack.c.l.b16 %v162
      %v195 = vunpack.c.l.b16 %v163
      %v196 = vunpack.c.l.b16 %v164
      %v197 = vunpack.c.l.b16 %v165
      %v198 = vunpack.c.l.b16 %v166
      %v199 = vunpack.c.l.b16 %v167
      %v200 = vunpack.c.l.b16 %v168
      %v201 = vunpack.c.l.b16 %v169
      %v202 = vunpack.c.l.b16 %v170
      %v203 = vunpack.c.l.b16 %v171
      %v204 = vunpack.c.l.b16 %v172
      %v205 = vunpack.c.l.b16 %v173
      %v206 = vunpack.c.l.b16 %v174
      %v207 = vunpack.c.l.b16 %v175
      %v208 = vunpack.c.l.b16 %v176
      %v209 = vunpack.c.l.b16 %v177
      %v210 = vpack.c.b16 %v195, %v194
      %v211 = vpack.c.b16 %v197, %v196
      %v212 = vpack.c.b16 %v199, %v198
      %v213 = vpack.c.b16 %v201, %v200
      %v214 = vpack.c.b16 %v203, %v202
      %v215 = vpack.c.b16 %v205, %v204
      %v216 = vpack.c.b16 %v207, %v206
      %v217 = vpack.c.b16 %v209, %v208
      %226 = vmatprep.subr.bf16.mxu0 0
      %227 = vmatpush1.bf16.msra.mxu0 %v217
      %228 = vmatprep.subr.bf16.mxu0 0
      %229 = vmatpush1.bf16.msra.mxu0 %v216
      %230 = vmatprep.subr.bf16.mxu0 0
      %231 = vmatpush1.bf16.msra.mxu0 %v215
      %232 = vmatprep.subr.bf16.mxu0 0
      %233 = vmatpush1.bf16.msra.mxu0 %v214
      %234 = vmatprep.subr.bf16.mxu0 0
      %235 = vmatpush1.bf16.msra.mxu0 %v213
      %236 = vmatprep.subr.bf16.mxu0 0
      %237 = vmatpush1.bf16.msra.mxu0 %v212
      %238 = vmatprep.subr.bf16.mxu0 0
      %239 = vmatpush1.bf16.msra.mxu0 %v211
      %240 = vmatprep.subr.bf16.mxu0 0
      %241 = vmatpush1.bf16.msra.mxu0 %v210
      %242 = vmatprep.subr.bf16.mxu0 0
      %243 = vmatpush2.bf16.msra.mxu0 0
      %244 = vmatprep.subr.bf16.mxu0 0
      %245 = vmatpush2.bf16.msra.mxu0 0
      %246 = vmatprep.subr.bf16.mxu0 0
      %247 = vmatpush2.bf16.msra.mxu0 0
      %248 = vmatprep.subr.bf16.mxu0 0
      %249 = vmatpush2.bf16.msra.mxu0 0
      %250 = vmatprep.subr.bf16.mxu0 0
      %251 = vmatpush2.bf16.msra.mxu0 0
      %252 = vmatprep.subr.bf16.mxu0 0
      %253 = vmatpush2.bf16.msra.mxu0 0
      %254 = vmatprep.subr.bf16.mxu0 0
      %255 = vmatpush2.bf16.msra.mxu0 0
      %256 = vmatprep.subr.bf16.mxu0 0
      %257 = vmatpush2.bf16.msra.mxu0 0
      %258 = vmatprep.mubr.bf16.mxu0 0
      %259 = vmatmul.mubr.bf16.gmra.mxu0 %v159
      %v260 = vpop.f32.mrf.mxu0
      %v261 = vadd.f32 0.0, %v260
      %v262 = vpop.f32.mrf.mxu0
      %v263 = vpop.f32.mrf.mxu0
      %v264 = vadd.f32 0.0, %v263
      %v265 = vpop.f32.mrf.mxu0
      %266 = vmatprep.mubr.bf16.mxu0 0
      %267 = vmatmul.mubr.bf16.gmra.mxu0 %v160
      %v268 = vpop.f32.mrf.mxu0
      %v269 = vadd.f32 0.0, %v268
      %v270 = vpop.f32.mrf.mxu0
      %v271 = vpop.f32.mrf.mxu0
      %v272 = vadd.f32 0.0, %v271
      %v273 = vpop.f32.mrf.mxu0
      %274 = vmatprep.mubr.bf16.mxu0 0
      %275 = vmatmul.mubr.bf16.gmra.mxu0 %v161
      %v276 = vpop.f32.mrf.mxu0
      %v277 = vadd.f32 0.0, %v276
      %v278 = vpop.f32.mrf.mxu0
      %v279 = vpop.f32.mrf.mxu0
      %v280 = vadd.f32 0.0, %v279
      %v281 = vpop.f32.mrf.mxu0
      %282 = vdwg.mxu0
      %283 = vst [vmem:[#allocation2] sm:$0xff] %v261
      %284 = vst [vmem:[#allocation2 + $0x8] sm:$0xff] %v264
      %285 = vst [vmem:[#allocation2 + $0x10] sm:$0xff] %v269
      %286 = vst [vmem:[#allocation2 + $0x18] sm:$0xff] %v272
      %287 = vst [vmem:[#allocation2 + $0x20] sm:$0xff] %v277
      %288 = vst [vmem:[#allocation2 + $0x28] sm:$0xff] %v280
    $region89: #{decoder_steps.1} parent=1 // pred_fallthru
      _
    %v289 = vld [vmem:[#allocation3] sm:$0xff]
    %s290 = scalar_lea.vmem [#allocation3], 8
    %v291 = vld [vmem:[%s290] sm:$0xff]
    %v292 = vld [vmem:[%s0] sm:$0xff]
    %v293 = vld [vmem:[#allocation4] sm:$0xff]
    %v294 = vld [vmem:[#allocation4 + $0x8] sm:$0xff]
    %v295 = vld [vmem:[#allocation4 + $0x10] sm:$0xff]
    %v296 = vld [vmem:[#allocation4 + $0x18] sm:$0xff]
    %v297 = vld [vmem:[#allocation4 + $0x20] sm:$0xff]
    %v298 = vld [vmem:[#allocation4 + $0x28] sm:$0xff]
    %v299 = vpack.c.bf16 %v291, %v291
    %v300 = vld [vmem:[#allocation8] sm:$0xf]
    %v301 = vld [vmem:[#allocation8 + $0x4] sm:$0xf]
    %v302 = vld [vmem:[#allocation8 + $0x8] sm:$0xf]
    %v303 = vld [vmem:[#allocation8 + $0xc] sm:$0xf]
    %v304 = vld [vmem:[#allocation8 + $0x10] sm:$0xf]
    %v305 = vld [vmem:[#allocation8 + $0x14] sm:$0xf]
    %v306 = vld [vmem:[#allocation8 + $0x18] sm:$0xf]
    %v307 = vld [vmem:[#allocation8 + $0x1c] sm:$0xf]
    %v308 = vld [vmem:[#allocation8 + $0x20] sm:$0xf]
    %v309 = vld [vmem:[#allocation8 + $0x24] sm:$0xf]
    %v310 = vld [vmem:[#allocation8 + $0x28] sm:$0xf]
    %v311 = vld [vmem:[#allocation8 + $0x2c] sm:$0xf]
    %v312 = vld [vmem:[#allocation8 + $0x30] sm:$0xf]
    %v313 = vld [vmem:[#allocation8 + $0x34] sm:$0xf]
    %v314 = vld [vmem:[#allocation8 + $0x38] sm:$0xf]
    %v315 = vld [vmem:[#allocation8 + $0x3c] sm:$0xf]
    %v332 = vunpack.c.l.b16 %v300
    %v333 = vunpack.c.l.b16 %v301
    %v334 = vunpack.c.l.b16 %v302
    %v335 = vunpack.c.l.b16 %v303
    %v336 = vunpack.c.l.b16 %v304
    %v337 = vunpack.c.l.b16 %v305
    %v338 = vunpack.c.l.b16 %v306
    %v339 = vunpack.c.l.b16 %v307
    %v340 = vunpack.c.l.b16 %v308
    %v341 = vunpack.c.l.b16 %v309
    %v342 = vunpack.c.l.b16 %v310
    %v343 = vunpack.c.l.b16 %v311
    %v344 = vunpack.c.l.b16 %v312
    %v345 = vunpack.c.l.b16 %v313
    %v346 = vunpack.c.l.b16 %v314
    %v347 = vunpack.c.l.b16 %v315
    %v348 = vpack.c.b16 %v333, %v332
    %v349 = vpack.c.b16 %v335, %v334
    %v350 = vpack.c.b16 %v337, %v336
    %v351 = vpack.c.b16 %v339, %v338
    %v352 = vpack.c.b16 %v341, %v340
    %v353 = vpack.c.b16 %v343, %v342
    %v354 = vpack.c.b16 %v345, %v344
    %v355 = vpack.c.b16 %v347, %v346
    %364 = vmatprep.subr.bf16.mxu0 0
    %365 = vmatpush1.bf16.msra.mxu0 %v355
    %366 = vmatprep.subr.bf16.mxu0 0
    %367 = vmatpush1.bf16.msra.mxu0 %v354
    %368 = vmatprep.subr.bf16.mxu0 0
    %369 = vmatpush1.bf16.msra.mxu0 %v353
    %370 = vmatprep.subr.bf16.mxu0 0
    %371 = vmatpush1.bf16.msra.mxu0 %v352
    %372 = vmatprep.subr.bf16.mxu0 0
    %373 = vmatpush1.bf16.msra.mxu0 %v351
    %374 = vmatprep.subr.bf16.mxu0 0
    %375 = vmatpush1.bf16.msra.mxu0 %v350
    %376 = vmatprep.subr.bf16.mxu0 0
    %377 = vmatpush1.bf16.msra.mxu0 %v349
    %378 = vmatprep.subr.bf16.mxu0 0
    %379 = vmatpush1.bf16.msra.mxu0 %v348
    %380 = vmatprep.subr.bf16.mxu0 0
    %381 = vmatpush2.bf16.msra.mxu0 0
    %382 = vmatprep.subr.bf16.mxu0 0
    %383 = vmatpush2.bf16.msra.mxu0 0
    %384 = vmatprep.subr.bf16.mxu0 0
    %385 = vmatpush2.bf16.msra.mxu0 0
    %386 = vmatprep.subr.bf16.mxu0 0
    %387 = vmatpush2.bf16.msra.mxu0 0
    %388 = vmatprep.subr.bf16.mxu0 0
    %389 = vmatpush2.bf16.msra.mxu0 0
    %390 = vmatprep.subr.bf16.mxu0 0
    %391 = vmatpush2.bf16.msra.mxu0 0
    %392 = vmatprep.subr.bf16.mxu0 0
    %393 = vmatpush2.bf16.msra.mxu0 0
    %394 = vmatprep.subr.bf16.mxu0 0
    %395 = vmatpush2.bf16.msra.mxu0 0
    %396 = vmatprep.mubr.bf16.mxu0 0
    %397 = vmatmul.mubr.bf16.gmra.mxu0 %v299
    %v398 = vpop.f32.mrf.mxu0
    %v399 = vadd.f32 0.0, %v398
    %v400 = vpop.f32.mrf.mxu0
    %v401 = vpop.f32.mrf.mxu0
    %v402 = vpop.f32.mrf.mxu0
    %403 = vdwg.mxu0
    %v404 = vld [vmem:[#allocation2] sm:$0xff]
    %v405 = vld [vmem:[#allocation2 + $0x8] sm:$0xff]
    %v406 = vld [vmem:[#allocation2 + $0x10] sm:$0xff]
    %v407 = vld [vmem:[#allocation2 + $0x18] sm:$0xff]
    %v408 = vld [vmem:[#allocation2 + $0x20] sm:$0xff]
    %v409 = vld [vmem:[#allocation2 + $0x28] sm:$0xff]
    %v410 = vadd.f32 %v404, %v399
    %v411 = vadd.f32 %v405, %v399
    %v412 = vadd.f32 %v406, %v399
    %v413 = vadd.f32 %v407, %v399
    %v414 = vadd.f32 %v408, %v399
    %v415 = vadd.f32 %v409, %v399
    %v416 = vtanh.pop %v410
    %v417 = vtanh.pop %v411
    %v418 = vtanh.pop %v412
    %v419 = vtanh.pop %v413
    %v420 = vtanh.pop %v414
    %v421 = vtanh.pop %v415
    %v422 = vld [vmem:[%s5] sm:$0x1]
    %v424 = vlaneseq
    %v425 = vshrl.u32 %v424, 7
    %v426 = vsub.s32 0, %v425
    %v427 = vrot.slane %v422, %v426
    %v429 = vmul.f32 %v416, %v427
    %v430 = vmul.f32 %v417, %v427
    %v431 = vmul.f32 %v418, %v427
    %v432 = vmul.f32 %v419, %v427
    %v433 = vmul.f32 %v420, %v427
    %v434 = vmul.f32 %v421, %v427
    %435 = vadd.xlane.f32.xlu0 %v429
    %v436 = vpop.xlane.xlu0 %435
    %437 = vadd.xlane.f32.xlu0 %v430
    %v438 = vpop.xlane.xlu0 %437
    %439 = vadd.xlane.f32.xlu0 %v431
    %v440 = vpop.xlane.xlu0 %439
    %441 = vadd.xlane.f32.xlu0 %v432
    %v442 = vpop.xlane.xlu0 %441
    %443 = vadd.xlane.f32.xlu0 %v433
    %v444 = vpop.xlane.xlu0 %443
    %445 = vadd.xlane.f32.xlu0 %v434
    %v446 = vpop.xlane.xlu0 %445
    %v447 = vmax.f32 %v436, %v444
    %v448 = vmax.f32 %v438, %v446
    %v449 = vmax.f32 %v447, %v448
    %v450 = vmax.f32 %v440, %v442
    %v451 = vmax.f32 %v449, %v450
    %v452 = vsub.f32 %v436, %v451
    %v453 = vsub.f32 %v438, %v451
    %v454 = vsub.f32 %v440, %v451
    %v455 = vsub.f32 %v442, %v451
    %v456 = vsub.f32 %v444, %v451
    %v457 = vsub.f32 %v446, %v451
    %v458 = vmul.f32 %v452, 1.442695
    %v459 = vpow.pop %v458
    %v460 = vmul.f32 %v453, 1.442695
    %v461 = vpow.pop %v460
    %v462 = vmul.f32 %v454, 1.442695
    %v463 = vpow.pop %v462
    %v464 = vmul.f32 %v455, 1.442695
    %v465 = vpow.pop %v464
    %v466 = vmul.f32 %v456, 1.442695
    %v467 = vpow.pop %v466
    %v468 = vmul.f32 %v457, 1.442695
    %v469 = vpow.pop %v468
    %v470 = vadd.f32 %v459, %v461
    %v471 = vadd.f32 %v470, %v463
    %v472 = vadd.f32 %v471, %v465
    %v473 = vadd.f32 %v472, %v467
    %v474 = vadd.f32 %v473, %v469
    %v475 = vrcp.pop %v474
    %v476 = vmul.f32 %v459, %v475
    %v477 = vmul.f32 %v461, %v475
    %v478 = vmul.f32 %v463, %v475
    %v479 = vmul.f32 %v465, %v475
    %v480 = vmul.f32 %v467, %v475
    %v481 = vmul.f32 %v469, %v475
    %v482 = vmul.f32 %v476, %v293
    %v483 = vmul.f32 %v477, %v294
    %v484 = vmul.f32 %v478, %v295
    %v485 = vmul.f32 %v479, %v296
    %v486 = vmul.f32 %v480, %v297
    %v487 = vmul.f32 %v481, %v298
    %v488 = vadd.f32 %v482, %v483
    %v489 = vadd.f32 %v488, %v484
    %v490 = vadd.f32 %v489, %v485
    %v491 = vadd.f32 %v490, %v486
    %v492 = vadd.f32 %v491, %v487
    %v493 = vpack.c.bf16 %v492, %v492
    %v494 = vpack.c.bf16 %v292, %v292
    %v495 = vld [vmem:[#allocation9] sm:$0xf]
    %v496 = vld [vmem:[#allocation9 + $0x4] sm:$0xf]
    %v497 = vld [vmem:[#allocation9 + $0x8] sm:$0xf]
    %v498 = vld [vmem:[#allocation9 + $0xc] sm:$0xf]
    %v499 = vld [vmem:[#allocation9 + $0x10] sm:$0xf]
    %v500 = vld [vmem:[#allocation9 + $0x14] sm:$0xf]
    %v501 = vld [vmem:[#allocation9 + $0x18] sm:$0xf]
    %v502 = vld [vmem:[#allocation9 + $0x1c] sm:$0xf]
    %v503 = vld [vmem:[#allocation9 + $0x20] sm:$0xf]
    %v504 = vld [vmem:[#allocation9 + $0x24] sm:$0xf]
    %v505 = vld [vmem:[#allocation9 + $0x28] sm:$0xf]
    %v506 = vld [vmem:[#allocation9 + $0x2c] sm:$0xf]
    %v507 = vld [vmem:[#allocation9 + $0x30] sm:$0xf]
    %v508 = vld [vmem:[#allocation9 + $0x34] sm:$0xf]
    %v509 = vld [vmem:[#allocation9 + $0x38] sm:$0xf]
    %v510 = vld [vmem:[#allocation9 + $0x3c] sm:$0xf]
    %v511 = vld [vmem:[#allocation9 + $0x40] sm:$0xf]
    %v512 = vld [vmem:[#allocation9 + $0x44] sm:$0xf]
    %v513 = vld [vmem:[#allocation9 + $0x48] sm:$0xf]
    %v514 = vld [vmem:[#allocation9 + $0x4c] sm:$0xf]
    %v515 = vld [vmem:[#allocation9 + $0x50] sm:$0xf]
    %v516 = vld [vmem:[#allocation9 + $0x54] sm:$0xf]
    %v517 = vld [vmem:[#allocation9 + $0x58] sm:$0xf]
    %v518 = vld [vmem:[#allocation9 + $0x5c] sm:$0xf]
    %v519 = vld [vmem:[#allocation9 + $0x60] sm:$0xf]
    %v520 = vld [vmem:[#allocation9 + $0x64] sm:$0xf]
    %v521 = vld [vmem:[#allocation9 + $0x68] sm:$0xf]
    %v522 = vld [vmem:[#allocation9 + $0x6c] sm:$0xf]
    %v523 = vld [vmem:[#allocation9 + $0x70] sm:$0xf]
    %v524 = vld [vmem:[#allocation9 + $0x74] sm:$0xf]
    %v525 = vld [vmem:[#allocation9 + $0x78] sm:$0xf]
    %v526 = vld [vmem:[#allocation9 + $0x7c] sm:$0xf]
    %v527 = vld [vmem:[%s7] sm:$0x1]
    %v529 = vlaneseq
    %v530 = vshrl.u32 %v529, 7
    %v531 = vsub.s32 0, %v530
    %v532 = vrot.slane %v527, %v531
    %v566 = vunpack.c.l.b16 %v495
    %v567 = vunpack.c.l.b16 %v496
    %v568 = vunpack.c.l.b16 %v497
    %v569 = vunpack.c.l.b16 %v498
    %v570 = vunpack.c.l.b16 %v499
    %v571 = vunpack.c.l.b16 %v500
    %v572 = vunpack.c.l.b16 %v501
    %v573 = vunpack.c.l.b16 %v502
    %v574 = vunpack.c.l.b16 %v503
    %v575 = vunpack.c.l.b16 %v504
    %v576 = vunpack.c.l.b16 %v505
    %v577 = vunpack.c.l.b16 %v506
    %v578 = vunpack.c.l.b16 %v507
    %v579 = vunpack.c.l.b16 %v508
    %v580 = vunpack.c.l.b16 %v509
    %v581 = vunpack.c.l.b16 %v510
    %v582 = vunpack.c.l.b16 %v511
    %v583 = vunpack.c.l.b16 %v512
    %v584 = vunpack.c.l.b16 %v513
    %v585 = vunpack.c.l.b16 %v514
    %v586 = vunpack.c.l.b16 %v515
    %v587 = vunpack.c.l.b16 %v516
    %v588 = vunpack.c.l.b16 %v517
    %v589 = vunpack.c.l.b16 %v518
    %v590 = vunpack.c.l.b16 %v519
    %v591 = vunpack.c.l.b16 %v520
    %v592 = vunpack.c.l.b16 %v521
    %v593 = vunpack.c.l.b16 %v522
    %v594 = vunpack.c.l.b16 %v523
    %v595 = vunpack.c.l.b16 %v524
    %v596 = vunpack.c.l.b16 %v525
    %v597 = vunpack.c.l.b16 %v526
    %v598 = vpack.c.b16 %v567, %v566
    %v599 = vpack.c.b16 %v569, %v568
    %v600 = vpack.c.b16 %v571, %v570
    %v601 = vpack.c.b16 %v573, %v572
    %v602 = vpack.c.b16 %v575, %v574
    %v603 = vpack.c.b16 %v577, %v576
    %v604 = vpack.c.b16 %v579, %v578
    %v605 = vpack.c.b16 %v581, %v580
    %v606 = vpack.c.b16 %v583, %v582
    %v607 = vpack.c.b16 %v585, %v584
    %v608 = vpack.c.b16 %v587, %v586
    %v609 = vpack.c.b16 %v589, %v588
    %v610 = vpack.c.b16 %v591, %v590
    %v611 = vpack.c.b16 %v593, %v592
    %v612 = vpack.c.b16 %v595, %v594
    %v613 = vpack.c.b16 %v597, %v596
    %630 = vmatprep.subr.bf16.mxu0 0
    %631 = vmatpush1.bf16.msra.mxu0 %v605
    %632 = vmatprep.subr.bf16.mxu0 0
    %633 = vmatpush1.bf16.msra.mxu0 %v604
    %634 = vmatprep.subr.bf16.mxu0 0
    %635 = vmatpush1.bf16.msra.mxu0 %v603
    %636 = vmatprep.subr.bf16.mxu0 0
    %637 = vmatpush1.bf16.msra.mxu0 %v602
    %638 = vmatprep.subr.bf16.mxu0 0
    %639 = vmatpush1.bf16.msra.mxu0 %v601
    %640 = vmatprep.subr.bf16.mxu0 0
    %641 = vmatpush1.bf16.msra.mxu0 %v600
    %642 = vmatprep.subr.bf16.mxu0 0
    %643 = vmatpush1.bf16.msra.mxu0 %v599
    %644 = vmatprep.subr.bf16.mxu0 0
    %645 = vmatpush1.bf16.msra.mxu0 %v598
    %646 = vmatprep.subr.bf16.mxu0 0
    %647 = vmatpush2.bf16.msra.mxu0 %v613
    %648 = vmatprep.subr.bf16.mxu0 0
    %649 = vmatpush2.bf16.msra.mxu0 %v612
    %650 = vmatprep.subr.bf16.mxu0 0
    %651 = vmatpush2.bf16.msra.mxu0 %v611
    %652 = vmatprep.subr.bf16.mxu0 0
    %653 = vmatpush2.bf16.msra.mxu0 %v610
    %654 = vmatprep.subr.bf16.mxu0 0
    %655 = vmatpush2.bf16.msra.mxu0 %v609
    %656 = vmatprep.subr.bf16.mxu0 0
    %657 = vmatpush2.bf16.msra.mxu0 %v608
    %658 = vmatprep.subr.bf16.mxu0 0
    %659 = vmatpush2.bf16.msra.mxu0 %v607
    %660 = vmatprep.subr.bf16.mxu0 0
    %661 = vmatpush2.bf16.msra.mxu0 %v606
    %662 = vmatprep.mubr.bf16.mxu0 %v494
    %663 = vmatmul.mubr.bf16.gmra.mxu0 %v493
    %v664 = vpop.f32.mrf.mxu0
    %v665 = vadd.f32 %v532, %v664
    %v666 = vpop.f32.mrf.mxu0
    %v667 = vpop.f32.mrf.mxu0
    %v668 = vpop.f32.mrf.mxu0
    %669 = vdwg.mxu0
    %v670 = vpack.c.bf16 %v665, %v665
    %v671 = vpack.c.bf16 %v289, %v289
    %v672 = vld [vmem:[#allocation11] sm:$0xff]
    %v673 = vld [vmem:[#allocation11 + $0x8] sm:$0xf]
    %v674 = vld [vmem:[#allocation11 + $0xc] sm:$0xff]
    %v675 = vld [vmem:[#allocation11 + $0x14] sm:$0xf]
    %v676 = vld [vmem:[#allocation11 + $0x18] sm:$0xff]
    %v677 = vld [vmem:[#allocation11 + $0x20] sm:$0xf]
    %v678 = vld [vmem:[#allocation11 + $0x24] sm:$0xff]
    %v679 = vld [vmem:[#allocation11 + $0x2c] sm:$0xf]
    %v680 = vld [vmem:[#allocation11 + $0x30] sm:$0xff]
    %v681 = vld [vmem:[#allocation11 + $0x38] sm:$0xf]
    %v682 = vld [vmem:[#allocation11 + $0x3c] sm:$0xff]
    %v683 = vld [vmem:[#allocation11 + $0x44] sm:$0xf]
    %v684 = vld [vmem:[#allocation11 + $0x48] sm:$0xff]
    %v685 = vld [vmem:[#allocation11 + $0x50] sm:$0xf]
    %v686 = vld [vmem:[#allocation11 + $0x54] sm:$0xff]
    %v687 = vld [vmem:[#allocation11 + $0x5c] sm:$0xf]
    %v688 = vld [vmem:[#allocation11 + $0x60] sm:$0xff]
    %v689 = vld [vmem:[#allocation11 + $0x68] sm:$0xf]
    %v690 = vld [vmem:[#allocation11 + $0x6c] sm:$0xff]
    %v691 = vld [vmem:[#allocation11 + $0x74] sm:$0xf]
    %v692 = vld [vmem:[#allocation11 + $0x78] sm:$0xff]
    %v693 = vld [vmem:[#allocation11 + $0x80] sm:$0xf]
    %v694 = vld [vmem:[#allocation11 + $0x84] sm:$0xff]
    %v695 = vld [vmem:[#allocation11 + $0x8c] sm:$0xf]
    %v696 = vld [vmem:[#allocation11 + $0x90] sm:$0xff]
    %v697 = vld [vmem:[#allocation11 + $0x98] sm:$0xf]
    %v698 = vld [vmem:[#allocation11 + $0x9c] sm:$0xff]
    %v699 = vld [vmem:[#allocation11 + $0xa4] sm:$0xf]
    %v700 = vld [vmem:[#allocation11 + $0xa8] sm:$0xff]
    %v701 = vld [vmem:[#allocation11 + $0xb0] sm:$0xf]
    %v702 = vld [vmem:[#allocation11 + $0xb4] sm:$0xff]
    %v703 = vld [vmem:[#allocation11 + $0xbc] sm:$0xf]
    %v704 = vld [vmem:[#allocation11 + $0xc0] sm:$0xff]
    %v705 = vld [vmem:[#allocation11 + $0xc8] sm:$0xf]
    %v706 = vld [vmem:[#allocation11 + $0xcc] sm:$0xff]
    %v707 = vld [vmem:[#allocation11 + $0xd4] sm:$0xf]
    %v708 = vld [vmem:[#allocation11 + $0xd8] sm:$0xff]
    %v709 = vld [vmem:[#allocation11 + $0xe0] sm:$0xf]
    %v710 = vld [vmem:[#allocation11 + $0xe4] sm:$0xff]
    %v711 = vld [vmem:[#allocation11 + $0xec] sm:$0xf]
    %v712 = vld [vmem:[#allocation11 + $0xf0] sm:$0xff]
    %v713 = vld [vmem:[#allocation11 + $0xf8] sm:$0xf]
    %v714 = vld [vmem:[#allocation11 + $0xfc] sm:$0xff]
    %v715 = vld [vmem:[#allocation11 + $0x104] sm:$0xf]
    %v716 = vld [vmem:[#allocation11 + $0x108] sm:$0xff]
    %v717 = vld [vmem:[#allocation11 + $0x110] sm:$0xf]
    %v718 = vld [vmem:[#allocation11 + $0x114] sm:$0xff]
    %v719 = vld [vmem:[#allocation11 + $0x11c] sm:$0xf]
    %v720 = vld [vmem:[#allocation11 + $0x120] sm:$0xff]
    %v721 = vld [vmem:[#allocation11 + $0x128] sm:$0xf]
    %v722 = vld [vmem:[#allocation11 + $0x12c] sm:$0xff]
    %v723 = vld [vmem:[#allocation11 + $0x134] sm:$0xf]
    %v724 = vld [vmem:[#allocation11 + $0x138] sm:$0xff]
    %v725 = vld [vmem:[#allocation11 + $0x140] sm:$0xf]
    %v726 = vld [vmem:[#allocation11 + $0x144] sm:$0xff]
    %v727 = vld [vmem:[#allocation11 + $0x14c] sm:$0xf]
    %v728 = vld [vmem:[#allocation11 + $0x150] sm:$0xff]
    %v729 = vld [vmem:[#allocation11 + $0x158] sm:$0xf]
    %v730 = vld [vmem:[#allocation11 + $0x15c] sm:$0xff]
    %v731 = vld [vmem:[#allocation11 + $0x164] sm:$0xf]
    %v732 = vld [vmem:[#allocation11 + $0x168] sm:$0xff]
    %v733 = vld [vmem:[#allocation11 + $0x170] sm:$0xf]
    %v734 = vld [vmem:[#allocation11 + $0x174] sm:$0xff]
    %v735 = vld [vmem:[#allocation11 + $0x17c] sm:$0xf]
    %v736 = vld [vmem:[%s9] sm:$0x7]
    %v738 = vlaneseq
    %v739 = vshrl.u32 %v738, 7
    %v740 = vsub.s32 0, %v739
    %v741 = vrot.slane %v736, %v740
    %v742 = vlaneseq
    %v743 = vshrl.u32 %v742, 7
    %v744 = vsub.s32 1, %v743
    %v745 = vrot.slane %v736, %v744
    %v746 = vlaneseq
    %v747 = vshrl.u32 %v746, 7
    %v748 = vsub.s32 2, %v747
    %v749 = vrot.slane %v736, %v748
    %v817 = vunpack.c.l.b16 %v672
    %v818 = vunpack.c.h.b16 %v672
    %v819 = vunpack.c.l.b16 %v673
    %v820 = vunpack.c.l.b16 %v674
    %v821 = vunpack.c.h.b16 %v674
    %v822 = vunpack.c.l.b16 %v675
    %v823 = vunpack.c.l.b16 %v676
    %v824 = vunpack.c.h.b16 %v676
    %v825 = vunpack.c.l.b16 %v677
    %v826 = vunpack.c.l.b16 %v678
    %v827 = vunpack.c.h.b16 %v678
    %v828 = vunpack.c.l.b16 %v679
    %v829 = vunpack.c.l.b16 %v680
    %v830 = vunpack.c.h.b16 %v680
    %v831 = vunpack.c.l.b16 %v681
    %v832 = vunpack.c.l.b16 %v682
    %v833 = vunpack.c.h.b16 %v682
    %v834 = vunpack.c.l.b16 %v683
    %v835 = vunpack.c.l.b16 %v684
    %v836 = vunpack.c.h.b16 %v684
    %v837 = vunpack.c.l.b16 %v685
    %v838 = vunpack.c.l.b16 %v686
    %v839 = vunpack.c.h.b16 %v686
    %v840 = vunpack.c.l.b16 %v687
    %v841 = vunpack.c.l.b16 %v688
    %v842 = vunpack.c.h.b16 %v688
    %v843 = vunpack.c.l.b16 %v689
    %v844 = vunpack.c.l.b16 %v690
    %v845 = vunpack.c.h.b16 %v690
    %v846 = vunpack.c.l.b16 %v691
    %v847 = vunpack.c.l.b16 %v692
    %v848 = vunpack.c.h.b16 %v692
    %v849 = vunpack.c.l.b16 %v693
    %v850 = vunpack.c.l.b16 %v694
    %v851 = vunpack.c.h.b16 %v694
    %v852 = vunpack.c.l.b16 %v695
    %v853 = vunpack.c.l.b16 %v696
    %v854 = vunpack.c.h.b16 %v696
    %v855 = vunpack.c.l.b16 %v697
    %v856 = vunpack.c.l.b16 %v698
    %v857 = vunpack.c.h.b16 %v698
    %v858 = vunpack.c.l.b16 %v699
    %v859 = vunpack.c.l.b16 %v700
    %v860 = vunpack.c.h.b16 %v700
    %v861 = vunpack.c.l.b16 %v701
    %v862 = vunpack.c.l.b16 %v702
    %v863 = vunpack.c.h.b16 %v702
    %v864 = vunpack.c.l.b16 %v703
    %v865 = vunpack.c.l.b16 %v704
    %v866 = vunpack.c.h.b16 %v704
    %v867 = vunpack.c.l.b16 %v705
    %v868 = vunpack.c.l.b16 %v706
    %v869 = vunpack.c.h.b16 %v706
    %v870 = vunpack.c.l.b16 %v707
    %v871 = vunpack.c.l.b16 %v708
    %v872 = vunpack.c.h.b16 %v708
    %v873 = vunpack.c.l.b16 %v709
    %v874 = vunpack.c.l.b16 %v710
    %v875 = vunpack.c.h.b16 %v710
    %v876 = vunpack.c.l.b16 %v711
    %v877 = vunpack.c.l.b16 %v712
    %v878 = vunpack.c.h.b16 %v712
    %v879 = vunpack.c.l.b16 %v713
    %v880 = vunpack.c.l.b16 %v714
    %v881 = vunpack.c.h.b16 %v714
    %v882 = vunpack.c.l.b16 %v715
    %v883 = vunpack.c.l.b16 %v716
    %v884 = vunpack.c.h.b16 %v716
    %v885 = vunpack.c.l.b16 %v717
    %v886 = vunpack.c.l.b16 %v718
    %v887 = vunpack.c.h.b16 %v718
    %v888 = vunpack.c.l.b16 %v719
    %v889 = vunpack.c.l.b16 %v720
    %v890 = vunpack.c.h.b16 %v720
    %v891 = vunpack.c.l.b16 %v721
    %v892 = vunpack.c.l.b16 %v722
    %v893 = vunpack.c.h.b16 %v722
    %v894 = vunpack.c.l.b16 %v723
    %v895 = vunpack.c.l.b16 %v724
    %v896 = vunpack.c.h.b16 %v724
    %v897 = vunpack.c.l.b16 %v725
    %v898 = vunpack.c.l.b16 %v726
    %v899 = vunpack.c.h.b16 %v726
    %v900 = vunpack.c.l.b16 %v727
    %v901 = vunpack.c.l.b16 %v728
    %v902 = vunpack.c.h.b16 %v728
    %v903 = vunpack.c.l.b16 %v729
    %v904 = vunpack.c.l.b16 %v730
    %v905 = vunpack.c.h.b16 %v730
    %v906 = vunpack.c.l.b16 %v731
    %v907 = vunpack.c.l.b16 %v732
    %v908 = vunpack.c.h.b16 %v732
    %v909 = vunpack.c.l.b16 %v733
    %v910 = vunpack.c.l.b16 %v734
    %v911 = vunpack.c.h.b16 %v734
    %v912 = vunpack.c.l.b16 %v735
    %v913 = vpack.c.b16 %v820, %v817
    %v914 = vpack.c.b16 %v821, %v818
    %v915 = vpack.c.b16 %v822, %v819
    %v916 = vpack.c.b16 %v826, %v823
    %v917 = vpack.c.b16 %v827, %v824
    %v918 = vpack.c.b16 %v828, %v825
    %v919 = vpack.c.b16 %v832, %v829
    %v920 = vpack.c.b16 %v833, %v830
    %v921 = vpack.c.b16 %v834, %v831
    %v922 = vpack.c.b16 %v838, %v835
    %v923 = vpack.c.b16 %v839, %v836
    %v924 = vpack.c.b16 %v840, %v837
    %v925 = vpack.c.b16 %v844, %v841
    %v926 = vpack.c.b16 %v845, %v842
    %v927 = vpack.c.b16 %v846, %v843
    %v928 = vpack.c.b16 %v850, %v847
    %v929 = vpack.c.b16 %v851, %v848
    %v930 = vpack.c.b16 %v852, %v849
    %v931 = vpack.c.b16 %v856, %v853
    %v932 = vpack.c.b16 %v857, %v854
    %v933 = vpack.c.b16 %v858, %v855
    %v934 = vpack.c.b16 %v862, %v859
    %v935 = vpack.c.b16 %v863, %v860
    %v936 = vpack.c.b16 %v864, %v861
    %v937 = vpack.c.b16 %v868, %v865
    %v938 = vpack.c.b16 %v869, %v866
    %v939 = vpack.c.b16 %v870, %v867
    %v940 = vpack.c.b16 %v874, %v871
    %v941 = vpack.c.b16 %v875, %v872
    %v942 = vpack.c.b16 %v876, %v873
    %v943 = vpack.c.b16 %v880, %v877
    %v944 = vpack.c.b16 %v881, %v878
    %v945 = vpack.c.b16 %v882, %v879
    %v946 = vpack.c.b16 %v886, %v883
    %v947 = vpack.c.b16 %v887, %v884
    %v948 = vpack.c.b16 %v888, %v885
    %v949 = vpack.c.b16 %v892, %v889
    %v950 = vpack.c.b16 %v893, %v890
    %v951 = vpack.c.b16 %v894, %v891
    %v952 = vpack.c.b16 %v898, %v895
    %v953 = vpack.c.b16 %v899, %v896
    %v954 = vpack.c.b16 %v900, %v897
    %v955 = vpack.c.b16 %v904, %v901
    %v956 = vpack.c.b16 %v905, %v902
    %v957 = vpack.c.b16 %v906, %v903
    %v958 = vpack.c.b16 %v910, %v907
    %v959 = vpack.c.b16 %v911, %v908
    %v960 = vpack.c.b16 %v912, %v909
    %1009 = vmatprep.subr.bf16.mxu0 %v935
    %1010 = vmatpush1.bf16.msra.mxu0 %v934
    %1011 = vmatprep.subr.bf16.mxu0 %v932
    %1012 = vmatpush1.bf16.msra.mxu0 %v931
    %1013 = vmatprep.subr.bf16.mxu0 %v929
    %1014 = vmatpush1.bf16.msra.mxu0 %v928
    %1015 = vmatprep.subr.bf16.mxu0 %v926
    %1016 = vmatpush1.bf16.msra.mxu0 %v925
    %1017 = vmatprep.subr.bf16.mxu0 %v923
    %1018 = vmatpush1.bf16.msra.mxu0 %v922
    %1019 = vmatprep.subr.bf16.mxu0 %v920
    %1020 = vmatpush1.bf16.msra.mxu0 %v919
    %1021 = vmatprep.subr.bf16.mxu0 %v917
    %1022 = vmatpush1.bf16.msra.mxu0 %v916
    %1023 = vmatprep.subr.bf16.mxu0 %v914
    %1024 = vmatpush1.bf16.msra.mxu0 %v913
    %1025 = vmatprep.subr.bf16.mxu0 %v959
    %1026 = vmatpush2.bf16.msra.mxu0 %v958
    %1027 = vmatprep.subr.bf16.mxu0 %v956
    %1028 = vmatpush2.bf16.msra.mxu0 %v955
    %1029 = vmatprep.subr.bf16.mxu0 %v953
    %1030 = vmatpush2.bf16.msra.mxu0 %v952
    %1031 = vmatprep.subr.bf16.mxu0 %v950
    %1032 = vmatpush2.bf16.msra.mxu0 %v949
    %1033 = vmatprep.subr.bf16.mxu0 %v947
    %1034 = vmatpush2.bf16.msra.mxu0 %v946
    %1035 = vmatprep.subr.bf16.mxu0 %v944
    %1036 = vmatpush2.bf16.msra.mxu0 %v943
    %1037 = vmatprep.subr.bf16.mxu0 %v941
    %1038 = vmatpush2.bf16.msra.mxu0 %v940
    %1039 = vmatprep.subr.bf16.mxu0 %v938
    %1040 = vmatpush2.bf16.msra.mxu0 %v937
    %1041 = vmatprep.mubr.bf16.mxu0 %v671
    %1042 = vmatmul.mubr.bf16.gmra.mxu0 %v670
    %v1043 = vpop.f32.mrf.mxu0
    %v1044 = vadd.f32 %v741, %v1043
    %v1045 = vpop.f32.mrf.mxu0
    %v1046 = vadd.f32 %v745, %v1045
    %v1047 = vpop.f32.mrf.mxu0
    %v1048 = vpop.f32.mrf.mxu0
    %1049 = vdwg.mxu0
    %1050 = vmatprep.subr.bf16.mxu0 0
    %1051 = vmatpush1.bf16.msra.mxu0 %v936
    %1052 = vmatprep.subr.bf16.mxu0 0
    %1053 = vmatpush1.bf16.msra.mxu0 %v933
    %1054 = vmatprep.subr.bf16.mxu0 0
    %1055 = vmatpush1.bf16.msra.mxu0 %v930
    %1056 = vmatprep.subr.bf16.mxu0 0
    %1057 = vmatpush1.bf16.msra.mxu0 %v927
    %1058 = vmatprep.subr.bf16.mxu0 0
    %1059 = vmatpush1.bf16.msra.mxu0 %v924
    %1060 = vmatprep.subr.bf16.mxu0 0
    %1061 = vmatpush1.bf16.msra.mxu0 %v921
    %1062 = vmatprep.subr.bf16.mxu0 0
    %1063 = vmatpush1.bf16.msra.mxu0 %v918
    %1064 = vmatprep.subr.bf16.mxu0 0
    %1065 = vmatpush1.bf16.msra.mxu0 %v915
    %1066 = vmatprep.subr.bf16.mxu0 0
    %1067 = vmatpush2.bf16.msra.mxu0 %v960
    %1068 = vmatprep.subr.bf16.mxu0 0
    %1069 = vmatpush2.bf16.msra.mxu0 %v957
    %1070 = vmatprep.subr.bf16.mxu0 0
    %1071 = vmatpush2.bf16.msra.mxu0 %v954
    %1072 = vmatprep.subr.bf16.mxu0 0
    %1073 = vmatpush2.bf16.msra.mxu0 %v951
    %1074 = vmatprep.subr.bf16.mxu0 0
    %1075 = vmatpush2.bf16.msra.mxu0 %v948
    %1076 = vmatprep.subr.bf16.mxu0 0
    %1077 = vmatpush2.bf16.msra.mxu0 %v945
    %1078 = vmatprep.subr.bf16.mxu0 0
    %1079 = vmatpush2.bf16.msra.mxu0 %v942
    %1080 = vmatprep.subr.bf16.mxu0 0
    %1081 = vmatpush2.bf16.msra.mxu0 %v939
    %1082 = vmatprep.mubr.bf16.mxu0 %v671
    %1083 = vmatmul.mubr.bf16.gmra.mxu0 %v670
    %v1084 = vpop.f32.mrf.mxu0
    %v1085 = vadd.f32 %v749, %v1084
    %v1086 = vpop.f32.mrf.mxu0
    %v1087 = vpop.f32.mrf.mxu0
    %v1088 = vpop.f32.mrf.mxu0
    %1089 = vdwg.mxu0
    %v1090 = vxor.u32 %v1044, 2147483648
    %v1091 = vmul.f32 %v1090, 1.442695
    %v1092 = vpow.pop %v1091
    %v1093 = vadd.f32 %v1092, 1.0
    %v1094 = vrcp.pop %v1093
    %v1095 = vmul.f32 1.0, %v1094
    %v1096 = vtanh.pop %v1046
    %v1097 = vmul.f32 %v1095, %v1096
    %v1098 = vxor.u32 %v1085, 2147483648
    %v1099 = vmul.f32 %v1098, 1.442695
    %v1100 = vpow.pop %v1099
    %v1101 = vadd.f32 %v1100, 1.0
    %v1102 = vrcp.pop %v1101
    %v1103 = vmul.f32 1.0, %v1102
    %v1104 = vtanh.pop %v1097
    %v1105 = vmul.f32 %v1103, %v1104
    %v1106 = vpack.c.bf16 %v1105, %v1105
    %v1107 = vld [vmem:[#allocation12] sm:$0xff]
    %v1108 = vld [vmem:[#allocation12 + $0x8] sm:$0xf]
    %v1109 = vld [vmem:[#allocation12 + $0xc] sm:$0xff]
    %v1110 = vld [vmem:[#allocation12 + $0x14] sm:$0xf]
    %v1111 = vld [vmem:[#allocation12 + $0x18] sm:$0xff]
    %v1112 = vld [vmem:[#allocation12 + $0x20] sm:$0xf]
    %v1113 = vld [vmem:[#allocation12 + $0x24] sm:$0xff]
    %v1114 = vld [vmem:[#allocation12 + $0x2c] sm:$0xf]
    %v1115 = vld [vmem:[#allocation12 + $0x30] sm:$0xff]
    %v1116 = vld [vmem:[#allocation12 + $0x38] sm:$0xf]
    %v1117 = vld [vmem:[#allocation12 + $0x3c] sm:$0xff]
    %v1118 = vld [vmem:[#allocation12 + $0x44] sm:$0xf]
    %v1119 = vld [vmem:[#allocation12 + $0x48] sm:$0xff]
    %v1120 = vld [vmem:[#allocation12 + $0x50] sm:$0xf]
    %v1121 = vld [vmem:[#allocation12 + $0x54] sm:$0xff]
    %v1122 = vld [vmem:[#allocation12 + $0x5c] sm:$0xf]
    %v1123 = vld [vmem:[#allocation12 + $0x60] sm:$0xff]
    %v1124 = vld [vmem:[#allocation12 + $0x68] sm:$0xf]
    %v1125 = vld [vmem:[#allocation12 + $0x6c] sm:$0xff]
    %v1126 = vld [vmem:[#allocation12 + $0x74] sm:$0xf]
    %v1127 = vld [vmem:[#allocation12 + $0x78] sm:$0xff]
    %v1128 = vld [vmem:[#allocation12 + $0x80] sm:$0xf]
    %v1129 = vld [vmem:[#allocation12 + $0x84] sm:$0xff]
    %v1130 = vld [vmem:[#allocation12 + $0x8c] sm:$0xf]
    %v1131 = vld [vmem:[#allocation12 + $0x90] sm:$0xff]
    %v1132 = vld [vmem:[#allocation12 + $0x98] sm:$0xf]
    %v1133 = vld [vmem:[#allocation12 + $0x9c] sm:$0xff]
    %v1134 = vld [vmem:[#allocation12 + $0xa4] sm:$0xf]
    %v1135 = vld [vmem:[#allocation12 + $0xa8] sm:$0xff]
    %v1136 = vld [vmem:[#allocation12 + $0xb0] sm:$0xf]
    %v1137 = vld [vmem:[#allocation12 + $0xb4] sm:$0xff]
    %v1138 = vld [vmem:[#allocation12 + $0xbc] sm:$0xf]
    %v1139 = vld [vmem:[#allocation12 + $0xc0] sm:$0xff]
    %v1140 = vld [vmem:[#allocation12 + $0xc8] sm:$0xf]
    %v1141 = vld [vmem:[#allocation12 + $0xcc] sm:$0xff]
    %v1142 = vld [vmem:[#allocation12 + $0xd4] sm:$0xf]
    %v1143 = vld [vmem:[#allocation12 + $0xd8] sm:$0xff]
    %v1144 = vld [vmem:[#allocation12 + $0xe0] sm:$0xf]
    %v1145 = vld [vmem:[#allocation12 + $0xe4] sm:$0xff]
    %v1146 = vld [vmem:[#allocation12 + $0xec] sm:$0xf]
    %v1147 = vld [vmem:[#allocation12 + $0xf0] sm:$0xff]
    %v1148 = vld [vmem:[#allocation12 + $0xf8] sm:$0xf]
    %v1149 = vld [vmem:[#allocation12 + $0xfc] sm:$0xff]
    %v1150 = vld [vmem:[#allocation12 + $0x104] sm:$0xf]
    %v1151 = vld [vmem:[#allocation12 + $0x108] sm:$0xff]
    %v1152 = vld [vmem:[#allocation12 + $0x110] sm:$0xf]
    %v1153 = vld [vmem:[#allocation12 + $0x114] sm:$0xff]
    %v1154 = vld [vmem:[#allocation12 + $0x11c] sm:$0xf]
    %v1155 = vld [vmem:[#allocation12 + $0x120] sm:$0xff]
    %v1156 = vld [vmem:[#allocation12 + $0x128] sm:$0xf]
    %v1157 = vld [vmem:[#allocation12 + $0x12c] sm:$0xff]
    %v1158 = vld [vmem:[#allocation12 + $0x134] sm:$0xf]
    %v1159 = vld [vmem:[#allocation12 + $0x138] sm:$0xff]
    %v1160 = vld [vmem:[#allocation12 + $0x140] sm:$0xf]
    %v1161 = vld [vmem:[#allocation12 + $0x144] sm:$0xff]
    %v1162 = vld [vmem:[#allocation12 + $0x14c] sm:$0xf]
    %v1163 = vld [vmem:[#allocation12 + $0x150] sm:$0xff]
    %v1164 = vld [vmem:[#allocation12 + $0x158] sm:$0xf]
    %v1165 = vld [vmem:[#allocation12 + $0x15c] sm:$0xff]
    %v1166 = vld [vmem:[#allocation12 + $0x164] sm:$0xf]
    %v1167 = vld [vmem:[#allocation12 + $0x168] sm:$0xff]
    %v1168 = vld [vmem:[#allocation12 + $0x170] sm:$0xf]
    %v1169 = vld [vmem:[#allocation12 + $0x174] sm:$0xff]
    %v1170 = vld [vmem:[#allocation12 + $0x17c] sm:$0xf]
    %v1171 = vld [vmem:[%s11] sm:$0x7]
    %v1173 = vlaneseq
    %v1174 = vshrl.u32 %v1173, 7
    %v1175 = vsub.s32 0, %v1174
    %v1176 = vrot.slane %v1171, %v1175
    %v1177 = vlaneseq
    %v1178 = vshrl.u32 %v1177, 7
    %v1179 = vsub.s32 1, %v1178
    %v1180 = vrot.slane %v1171, %v1179
    %v1181 = vlaneseq
    %v1182 = vshrl.u32 %v1181, 7
    %v1183 = vsub.s32 2, %v1182
    %v1184 = vrot.slane %v1171, %v1183
    %v1252 = vunpack.c.l.b16 %v1107
    %v1253 = vunpack.c.h.b16 %v1107
    %v1254 = vunpack.c.l.b16 %v1108
    %v1255 = vunpack.c.l.b16 %v1109
    %v1256 = vunpack.c.h.b16 %v1109
    %v1257 = vunpack.c.l.b16 %v1110
    %v1258 = vunpack.c.l.b16 %v1111
    %v1259 = vunpack.c.h.b16 %v1111
    %v1260 = vunpack.c.l.b16 %v1112
    %v1261 = vunpack.c.l.b16 %v1113
    %v1262 = vunpack.c.h.b16 %v1113
    %v1263 = vunpack.c.l.b16 %v1114
    %v1264 = vunpack.c.l.b16 %v1115
    %v1265 = vunpack.c.h.b16 %v1115
    %v1266 = vunpack.c.l.b16 %v1116
    %v1267 = vunpack.c.l.b16 %v1117
    %v1268 = vunpack.c.h.b16 %v1117
    %v1269 = vunpack.c.l.b16 %v1118
    %v1270 = vunpack.c.l.b16 %v1119
    %v1271 = vunpack.c.h.b16 %v1119
    %v1272 = vunpack.c.l.b16 %v1120
    %v1273 = vunpack.c.l.b16 %v1121
    %v1274 = vunpack.c.h.b16 %v1121
    %v1275 = vunpack.c.l.b16 %v1122
    %v1276 = vunpack.c.l.b16 %v1123
    %v1277 = vunpack.c.h.b16 %v1123
    %v1278 = vunpack.c.l.b16 %v1124
    %v1279 = vunpack.c.l.b16 %v1125
    %v1280 = vunpack.c.h.b16 %v1125
    %v1281 = vunpack.c.l.b16 %v1126
    %v1282 = vunpack.c.l.b16 %v1127
    %v1283 = vunpack.c.h.b16 %v1127
    %v1284 = vunpack.c.l.b16 %v1128
    %v1285 = vunpack.c.l.b16 %v1129
    %v1286 = vunpack.c.h.b16 %v1129
    %v1287 = vunpack.c.l.b16 %v1130
    %v1288 = vunpack.c.l.b16 %v1131
    %v1289 = vunpack.c.h.b16 %v1131
    %v1290 = vunpack.c.l.b16 %v1132
    %v1291 = vunpack.c.l.b16 %v1133
    %v1292 = vunpack.c.h.b16 %v1133
    %v1293 = vunpack.c.l.b16 %v1134
    %v1294 = vunpack.c.l.b16 %v1135
    %v1295 = vunpack.c.h.b16 %v1135
    %v1296 = vunpack.c.l.b16 %v1136
    %v1297 = vunpack.c.l.b16 %v1137
    %v1298 = vunpack.c.h.b16 %v1137
    %v1299 = vunpack.c.l.b16 %v1138
    %v1300 = vunpack.c.l.b16 %v1139
    %v1301 = vunpack.c.h.b16 %v1139
    %v1302 = vunpack.c.l.b16 %v1140
    %v1303 = vunpack.c.l.b16 %v1141
    %v1304 = vunpack.c.h.b16 %v1141
    %v1305 = vunpack.c.l.b16 %v1142
    %v1306 = vunpack.c.l.b16 %v1143
    %v1307 = vunpack.c.h.b16 %v1143
    %v1308 = vunpack.c.l.b16 %v1144
    %v1309 = vunpack.c.l.b16 %v1145
    %v1310 = vunpack.c.h.b16 %v1145
    %v1311 = vunpack.c.l.b16 %v1146
    %v1312 = vunpack.c.l.b16 %v1147
    %v1313 = vunpack.c.h.b16 %v1147
    %v1314 = vunpack.c.l.b16 %v1148
    %v1315 = vunpack.c.l.b16 %v1149
    %v1316 = vunpack.c.h.b16 %v1149
    %v1317 = vunpack.c.l.b16 %v1150
    %v1318 = vunpack.c.l.b16 %v1151
    %v1319 = vunpack.c.h.b16 %v1151
    %v1320 = vunpack.c.l.b16 %v1152
    %v1321 = vunpack.c.l.b16 %v1153
    %v1322 = vunpack.c.h.b16 %v1153
    %v1323 = vunpack.c.l.b16 %v1154
    %v1324 = vunpack.c.l.b16 %v1155
    %v1325 = vunpack.c.h.b16 %v1155
    %v1326 = vunpack.c.l.b16 %v1156
    %v1327 = vunpack.c.l.b16 %v1157
    %v1328 = vunpack.c.h.b16 %v1157
    %v1329 = vunpack.c.l.b16 %v1158
    %v1330 = vunpack.c.l.b16 %v1159
    %v1331 = vunpack.c.h.b16 %v1159
    %v1332 = vunpack.c.l.b16 %v1160
    %v1333 = vunpack.c.l.b16 %v1161
    %v1334 = vunpack.c.h.b16 %v1161
    %v1335 = vunpack.c.l.b16 %v1162
    %v1336 = vunpack.c.l.b16 %v1163
    %v1337 = vunpack.c.h.b16 %v1163
    %v1338 = vunpack.c.l.b16 %v1164
    %v1339 = vunpack.c.l.b16 %v1165
    %v1340 = vunpack.c.h.b16 %v1165
    %v1341 = vunpack.c.l.b16 %v1166
    %v1342 = vunpack.c.l.b16 %v1167
    %v1343 = vunpack.c.h.b16 %v1167
    %v1344 = vunpack.c.l.b16 %v1168
    %v1345 = vunpack.c.l.b16 %v1169
    %v1346 = vunpack.c.h.b16 %v1169
    %v1347 = vunpack.c.l.b16 %v1170
    %v1348 = vpack.c.b16 %v1255, %v1252
    %v1349 = vpack.c.b16 %v1256, %v1253
    %v1350 = vpack.c.b16 %v1257, %v1254
    %v1351 = vpack.c.b16 %v1261, %v1258
    %v1352 = vpack.c.b16 %v1262, %v1259
    %v1353 = vpack.c.b16 %v1263, %v1260
    %v1354 = vpack.c.b16 %v1267, %v1264
    %v1355 = vpack.c.b16 %v1268, %v1265
    %v1356 = vpack.c.b16 %v1269, %v1266
    %v1357 = vpack.c.b16 %v1273, %v1270
    %v1358 = vpack.c.b16 %v1274, %v1271
    %v1359 = vpack.c.b16 %v1275, %v1272
    %v1360 = vpack.c.b16 %v1279, %v1276
    %v1361 = vpack.c.b16 %v1280, %v1277
    %v1362 = vpack.c.b16 %v1281, %v1278
    %v1363 = vpack.c.b16 %v1285, %v1282
    %v1364 = vpack.c.b16 %v1286, %v1283
    %v1365 = vpack.c.b16 %v1287, %v1284
    %v1366 = vpack.c.b16 %v1291, %v1288
    %v1367 = vpack.c.b16 %v1292, %v1289
    %v1368 = vpack.c.b16 %v1293, %v1290
    %v1369 = vpack.c.b16 %v1297, %v1294
    %v1370 = vpack.c.b16 %v1298, %v1295
    %v1371 = vpack.c.b16 %v1299, %v1296
    %v1372 = vpack.c.b16 %v1303, %v1300
    %v1373 = vpack.c.b16 %v1304, %v1301
    %v1374 = vpack.c.b16 %v1305, %v1302
    %v1375 = vpack.c.b16 %v1309, %v1306
    %v1376 = vpack.c.b16 %v1310, %v1307
    %v1377 = vpack.c.b16 %v1311, %v1308
    %v1378 = vpack.c.b16 %v1315, %v1312
    %v1379 = vpack.c.b16 %v1316, %v1313
    %v1380 = vpack.c.b16 %v1317, %v1314
    %v1381 = vpack.c.b16 %v1321, %v1318
    %v1382 = vpack.c.b16 %v1322, %v1319
    %v1383 = vpack.c.b16 %v1323, %v1320
    %v1384 = vpack.c.b16 %v1327, %v1324
    %v1385 = vpack.c.b16 %v1328, %v1325
    %v1386 = vpack.c.b16 %v1329, %v1326
    %v1387 = vpack.c.b16 %v1333, %v1330
    %v1388 = vpack.c.b16 %v1334, %v1331
    %v1389 = vpack.c.b16 %v1335, %v1332
    %v1390 = vpack.c.b16 %v1339, %v1336
    %v1391 = vpack.c.b16 %v1340, %v1337
    %v1392 = vpack.c.b16 %v1341, %v1338
    %v1393 = vpack.c.b16 %v1345, %v1342
    %v1394 = vpack.c.b16 %v1346, %v1343
    %v1395 = vpack.c.b16 %v1347, %v1344
    %1444 = vmatprep.subr.bf16.mxu0 %v1370
    %1445 = vmatpush1.bf16.msra.mxu0 %v1369
    %1446 = vmatprep.subr.bf16.mxu0 %v1367
    %1447 = vmatpush1.bf16.msra.mxu0 %v1366
    %1448 = vmatprep.subr.bf16.mxu0 %v1364
    %1449 = vmatpush1.bf16.msra.mxu0 %v1363
    %1450 = vmatprep.subr.bf16.mxu0 %v1361
    %1451 = vmatpush1.bf16.msra.mxu0 %v1360
    %1452 = vmatprep.subr.bf16.mxu0 %v1358
    %1453 = vmatpush1.bf16.msra.mxu0 %v1357
    %1454 = vmatprep.subr.bf16.mxu0 %v1355
    %1455 = vmatpush1.bf16.msra.mxu0 %v1354
    %1456 = vmatprep.subr.bf16.mxu0 %v1352
    %1457 = vmatpush1.bf16.msra.mxu0 %v1351
    %1458 = vmatprep.subr.bf16.mxu0 %v1349
    %1459 = vmatpush1.bf16.msra.mxu0 %v1348
    %1460 = vmatprep.subr.bf16.mxu0 %v1394
    %1461 = vmatpush2.bf16.msra.mxu0 %v1393
    %1462 = vmatprep.subr.bf16.mxu0 %v1391
    %1463 = vmatpush2.bf16.msra.mxu0 %v1390
    %1464 = vmatprep.subr.bf16.mxu0 %v1388
    %1465 = vmatpush2.bf16.msra.mxu0 %v1387
    %1466 = vmatprep.subr.bf16.mxu0 %v1385
    %1467 = vmatpush2.bf16.msra.mxu0 %v1384
    %1468 = vmatprep.subr.bf16.mxu0 %v1382
    %1469 = vmatpush2.bf16.msra.mxu0 %v1381
    %1470 = vmatprep.subr.bf16.mxu0 %v1379
    %1471 = vmatpush2.bf16.msra.mxu0 %v1378
    %1472 = vmatprep.subr.bf16.mxu0 %v1376
    %1473 = vmatpush2.bf16.msra.mxu0 %v1375
    %1474 = vmatprep.subr.bf16.mxu0 %v1373
    %1475 = vmatpush2.bf16.msra.mxu0 %v1372
    %1476 = vmatprep.mubr.bf16.mxu0 %v299
    %1477 = vmatmul.mubr.bf16.gmra.mxu0 %v1106
    %v1478 = vpop.f32.mrf.mxu0
    %v1479 = vadd.f32 %v1176, %v1478
    %v1480 = vpop.f32.mrf.mxu0
    %v1481 = vadd.f32 %v1180, %v1480
    %v1482 = vpop.f32.mrf.mxu0
    %v1483 = vpop.f32.mrf.mxu0
    %1484 = vdwg.mxu0
    %1485 = vmatprep.subr.bf16.mxu0 0
    %1486 = vmatpush1.bf16.msra.mxu0 %v1371
    %1487 = vmatprep.subr.bf16.mxu0 0
    %1488 = vmatpush1.bf16.msra.mxu0 %v1368
    %1489 = vmatprep.subr.bf16.mxu0 0
    %1490 = vmatpush1.bf16.msra.mxu0 %v1365
    %1491 = vmatprep.subr.bf16.mxu0 0
    %1492 = vmatpush1.bf16.msra.mxu0 %v1362
    %1493 = vmatprep.subr.bf16.mxu0 0
    %1494 = vmatpush1.bf16.msra.mxu0 %v1359
    %1495 = vmatprep.subr.bf16.mxu0 0
    %1496 = vmatpush1.bf16.msra.mxu0 %v1356
    %1497 = vmatprep.subr.bf16.mxu0 0
    %1498 = vmatpush1.bf16.msra.mxu0 %v1353
    %1499 = vmatprep.subr.bf16.mxu0 0
    %1500 = vmatpush1.bf16.msra.mxu0 %v1350
    %1501 = vmatprep.subr.bf16.mxu0 0
    %1502 = vmatpush2.bf16.msra.mxu0 %v1395
    %1503 = vmatprep.subr.bf16.mxu0 0
    %1504 = vmatpush2.bf16.msra.mxu0 %v1392
    %1505 = vmatprep.subr.bf16.mxu0 0
    %1506 = vmatpush2.bf16.msra.mxu0 %v1389
    %1507 = vmatprep.subr.bf16.mxu0 0
    %1508 = vmatpush2.bf16.msra.mxu0 %v1386
    %1509 = vmatprep.subr.bf16.mxu0 0
    %1510 = vmatpush2.bf16.msra.mxu0 %v1383
    %1511 = vmatprep.subr.bf16.mxu0 0
    %1512 = vmatpush2.bf16.msra.mxu0 %v1380
    %1513 = vmatprep.subr.bf16.mxu0 0
    %1514 = vmatpush2.bf16.msra.mxu0 %v1377
    %1515 = vmatprep.subr.bf16.mxu0 0
    %1516 = vmatpush2.bf16.msra.mxu0 %v1374
    %1517 = vmatprep.mubr.bf16.mxu0 %v299
    %1518 = vmatmul.mubr.bf16.gmra.mxu0 %v1106
    %v1519 = vpop.f32.mrf.mxu0
    %v1520 = vadd.f32 %v1184, %v1519
    %v1521 = vpop.f32.mrf.mxu0
    %v1522 = vpop.f32.mrf.mxu0
    %v1523 = vpop.f32.mrf.mxu0
    %1524 = vdwg.mxu0
    %v1525 = vxor.u32 %v1479, 2147483648
    %v1526 = vmul.f32 %v1525, 1.442695
    %v1527 = vpow.pop %v1526
    %v1528 = vadd.f32 %v1527, 1.0
    %v1529 = vrcp.pop %v1528
    %v1530 = vmul.f32 1.0, %v1529
    %v1531 = vtanh.pop %v1481
    %v1532 = vmul.f32 %v1530, %v1531
    %v1533 = vxor.u32 %v1520, 2147483648
    %v1534 = vmul.f32 %v1533, 1.442695
    %v1535 = vpow.pop %v1534
    %v1536 = vadd.f32 %v1535, 1.0
    %v1537 = vrcp.pop %v1536
    %v1538 = vmul.f32 1.0, %v1537
    %v1539 = vtanh.pop %v1532
    %v1540 = vmul.f32 %v1538, %v1539
    %v1541 = vpack.c.bf16 %v1540, %v1540
    %v1542 = vld [vmem:[#allocation14] sm:$0xf]
    %v1543 = vld [vmem:[#allocation14 + $0x4] sm:$0xf]
    %v1544 = vld [vmem:[#allocation14 + $0x8] sm:$0xf]
    %v1545 = vld [vmem:[#allocation14 + $0xc] sm:$0xf]
    %v1546 = vld [vmem:[#allocation14 + $0x10] sm:$0xf]
    %v1547 = vld [vmem:[#allocation14 + $0x14] sm:$0xf]
    %v1548 = vld [vmem:[#allocation14 + $0x18] sm:$0xf]
    %v1549 = vld [vmem:[#allocation14 + $0x1c] sm:$0xf]
    %v1550 = vld [vmem:[#allocation14 + $0x20] sm:$0xf]
    %v1551 = vld [vmem:[#allocation14 + $0x24] sm:$0xf]
    %v1552 = vld [vmem:[#allocation14 + $0x28] sm:$0xf]
    %v1553 = vld [vmem:[#allocation14 + $0x2c] sm:$0xf]
    %v1554 = vld [vmem:[#allocation14 + $0x30] sm:$0xf]
    %v1555 = vld [vmem:[#allocation14 + $0x34] sm:$0xf]
    %v1556 = vld [vmem:[#allocation14 + $0x38] sm:$0xf]
    %v1557 = vld [vmem:[#allocation14 + $0x3c] sm:$0xf]
    %v1558 = vld [vmem:[%s13] sm:$0x1]
    %v1560 = vlaneseq
    %v1561 = vshrl.u32 %v1560, 7
    %v1562 = vsub.s32 0, %v1561
    %v1563 = vrot.slane %v1558, %v1562
    %v1581 = vunpack.c.l.b16 %v1542
    %v1582 = vunpack.c.l.b16 %v1543
    %v1583 = vunpack.c.l.b16 %v1544
    %v1584 = vunpack.c.l.b16 %v1545
    %v1585 = vunpack.c.l.b16 %v1546
    %v1586 = vunpack.c.l.b16 %v1547
    %v1587 = vunpack.c.l.b16 %v1548
    %v1588 = vunpack.c.l.b16 %v1549
    %v1589 = vunpack.c.l.b16 %v1550
    %v1590 = vunpack.c.l.b16 %v1551
    %v1591 = vunpack.c.l.b16 %v1552
    %v1592 = vunpack.c.l.b16 %v1553
    %v1593 = vunpack.c.l.b16 %v1554
    %v1594 = vunpack.c.l.b16 %v1555
    %v1595 = vunpack.c.l.b16 %v1556
    %v1596 = vunpack.c.l.b16 %v1557
    %v1597 = vpack.c.b16 %v1582, %v1581
    %v1598 = vpack.c.b16 %v1584, %v1583
    %v1599 = vpack.c.b16 %v1586, %v1585
    %v1600 = vpack.c.b16 %v1588, %v1587
    %v1601 = vpack.c.b16 %v1590, %v1589
    %v1602 = vpack.c.b16 %v1592, %v1591
    %v1603 = vpack.c.b16 %v1594, %v1593
    %v1604 = vpack.c.b16 %v1596, %v1595
    %1613 = vmatprep.subr.bf16.mxu0 0
    %1614 = vmatpush1.bf16.msra.mxu0 %v1604
    %1615 = vmatprep.subr.bf16.mxu0 0
    %1616 = vmatpush1.bf16.msra.mxu0 %v1603
    %1617 = vmatprep.subr.bf16.mxu0 0
    %1618 = vmatpush1.bf16.msra.mxu0 %v1602
    %1619 = vmatprep.subr.bf16.mxu0 0
    %1620 = vmatpush1.bf16.msra.mxu0 %v1601
    %1621 = vmatprep.subr.bf16.mxu0 0
    %1622 = vmatpush1.bf16.msra.mxu0 %v1600
    %1623 = vmatprep.subr.bf16.mxu0 0
    %1624 = vmatpush1.bf16.msra.mxu0 %v1599
    %1625 = vmatprep.subr.bf16.mxu0 0
    %1626 = vmatpush1.bf16.msra.mxu0 %v1598
    %1627 = vmatprep.subr.bf16.mxu0 0
    %1628 = vmatpush1.bf16.msra.mxu0 %v1597
    %1629 = vmatprep.subr.bf16.mxu0 0
    %1630 = vmatpush2.bf16.msra.mxu0 0
    %1631 = vmatprep.subr.bf16.mxu0 0
    %1632 = vmatpush2.bf16.msra.mxu0 0
    %1633 = vmatprep.subr.bf16.mxu0 0
    %1634 = vmatpush2.bf16.msra.mxu0 0
    %1635 = vmatprep.subr.bf16.mxu0 0
    %1636 = vmatpush2.bf16.msra.mxu0 0
    %1637 = vmatprep.subr.bf16.mxu0 0
    %1638 = vmatpush2.bf16.msra.mxu0 0
    %1639 = vmatprep.subr.bf16.mxu0 0
    %1640 = vmatpush2.bf16.msra.mxu0 0
    %1641 = vmatprep.subr.bf16.mxu0 0
    %1642 = vmatpush2.bf16.msra.mxu0 0
    %1643 = vmatprep.subr.bf16.mxu0 0
    %1644 = vmatpush2.bf16.msra.mxu0 0
    %1645 = vmatprep.mubr.bf16.mxu0 0
    %1646 = vmatmul.mubr.bf16.gmra.mxu0 %v1541
    %v1647 = vpop.f32.mrf.mxu0
    %v1648 = vadd.f32 %v1563, %v1647
    %v1649 = vpop.f32.mrf.mxu0
    %v1650 = vpop.f32.mrf.mxu0
    %v1651 = vpop.f32.mrf.mxu0
    %1652 = vdwg.mxu0
    %1653 = vst [vmem:[%s14] sm:$0xff] %v1648
    %1654 = vst [vmem:[#allocation3] sm:$0xff] %v1105
    %1655 = vst [vmem:[%s290] sm:$0xff] %v1540
    %1656 = vst [vmem:[%s15] sm:$0xff] %v1105
    %s1657 = scalar_lea.vmem %s15, 8
    %1658 = vst [vmem:[%s1657] sm:$0xff] %v1540
    // Predicated region
    $region90: #{decoder_steps.1} parent=1 // pred_check
      _
    $region91: #{decoder_steps.1} parent=1 // pred_check_branch
      %1660 = sbr.rel (0) target = $region93
    $region92: #{decoder_steps.1} parent=1 // pred_region
      _
    $region93: #{decoder_steps.1} parent=1 // pred_fallthru
      _
    // Predicated region
    $region94: #{decoder_steps.1} parent=1 // pred_check
      _
    $region95: #{decoder_steps.1} parent=1 // pred_check_branch
      %1662 = sbr.rel (0) target = $region97
    $region96: #{decoder_steps.1} parent=1 // pred_region
      _
    $region97: #{decoder_steps.1} parent=1 // pred_fallthru
      _
    // Predicated region
    $region98: #{decoder_steps.1} parent=1 // pred_check
      _
    $region99: #{decoder_steps.1} parent=1 // pred_check_branch
      %1664 = sbr.rel (0) target = $region101
    $region100: #{decoder_steps.1} parent=1 // pred_region
      _
    $region101: #{decoder_steps.1} parent=1 // pred_fallthru
      _
    // Predicated region
    $region102: #{decoder_steps.1} parent=1 // pred_check
      _
    $region103: #{decoder_steps.1} parent=1 // pred_check_branch
      %1666 = sbr.rel (0) target = $region105
    $region104: #{decoder_steps.1} parent=1 // pred_region
      _
    $region105: #{decoder_steps.1} parent=1 // pred_fallthru
      _
    %1667 = vsyncpa [#allocation5], 1
    %1668 = vsyncpa [#allocation7], 1
    %1669 = vsyncpa [#allocation10], 1
    %1670 = vsyncpa [#allocation13], 1

</llo_original>
